<compile_context>
chip_gen: v5e
topology: v5e:2x2
jax: 0.10.0
libtpu: 0.0.40
codegen_flags: <defaults>
</compile_context>

<pallas_src>
import functools

import jax
import jax.numpy as jnp
from jax import lax
from jax.experimental import pallas as pl
from jax.experimental.pallas import tpu as pltpu

MU_0 = 1.25663706212e-6          # scipy.constants.mu_0
EPSILON_0 = 8.8541878128e-12     # scipy.constants.epsilon_0
INV_MU_0 = 1.0 / MU_0
INV_EPSILON_0 = 1.0 / EPSILON_0
STEP_SECONDS = 300.0             # timedelta(minutes=5).total_seconds()


def _shift_pair(f):
    """Both one-step circular shifts of f along the seq (lane) axis.

    Which element of the pair is the i-1 / i+1 neighbour depends only on the
    roll-direction convention; all downstream math is invariant to it because
    coefficients are derived from the matching rolled coordinate planes.
    """
    s = f.shape[-1]
    return pltpu.roll(f, 1, axis=1), pltpu.roll(f, s - 1, axis=1)


def _fd_coeffs(da, db, a_valid, b_valid, interior):
    """Per-position 3-tap coefficients (cA, c0, cB) reproducing
    torch.gradient(..., edge_order=1) with non-uniform spacing:
        g = cA*f_A + c0*f + cB*f_B,
    where f_A / f_B are the two rolled copies of f and da / db their SIGNED
    coordinate offsets.  Interior points use the second-order non-uniform
    stencil; the two edge columns use the one-sided difference with the valid
    neighbour (the wrapped neighbour's coefficient is forced to 0)."""
    inv_den = 1.0 / (da * db * (db - da))          # garbage at edges; masked out
    ca_int = (db * db) * inv_den
    cb_int = -(da * da) * inv_den
    inv_edge = 1.0 / jnp.where(a_valid, da, db)    # 1 / offset of the valid edge nb
    ca = jnp.where(interior, ca_int, jnp.where(a_valid, inv_edge, 0.0))
    cb = jnp.where(interior, cb_int, jnp.where(b_valid, inv_edge, 0.0))
    c0 = -(ca + cb)
    return ca, c0, cb


def _uniform_fd_coeffs(diff_a_f, diff_b_f, a_valid, b_valid, interior, inv_h):
    """Same 3-tap coefficients for a UNIFORM spacing h (time axis): interior is
    the central difference ±1/(2h), edges the one-sided ±1/h.  1/h and 1/(2h)
    are compile-time constants — no runtime divides."""
    half = 0.5 * inv_h
    ca = diff_a_f * jnp.where(interior, half, jnp.where(a_valid, inv_h, 0.0))
    cb = diff_b_f * jnp.where(interior, half, jnp.where(b_valid, inv_h, 0.0))
    c0 = -(ca + cb)
    return ca, c0, cb


def _grad(coeffs, f, f_shifts):
    ca, c0, cb = coeffs
    f_a, f_b = f_shifts
    return ca * f_a + c0 * f + cb * f_b


def _ideal_mhd_kernel(B_ref, E_ref, v_ref, vd_ref, J_ref, r_ref,
                      rho_ref, p_ref, sigma_ref, out_ref, *, inv_n, inv_3n):
    @pl.when(pl.program_id(0) == 0)
    def _init():
        for k in range(8):
            out_ref[k] = jnp.float32(0.0)

    # ---- per-spacing stencil coefficients (hoisted; shared by all gradients) --
    shape = rho_ref.shape                         # (bt, S)
    idx = lax.broadcasted_iota(jnp.int32, shape, 1)
    idx_a, idx_b = _shift_pair(idx)
    diff_a = idx_a - idx
    diff_b = idx_b - idx
    a_valid = (diff_a * diff_a) == 1              # False only where the roll wrapped
    b_valid = (diff_b * diff_b) == 1
    interior = jnp.logical_and(a_valid, b_valid)

    rx, ry, rz = r_ref[0], r_ref[1], r_ref[2]

    def coord_coeffs(x):
        x_a, x_b = _shift_pair(x)
        return _fd_coeffs(x_a - x, x_b - x, a_valid, b_valid, interior)

    cx = coord_coeffs(rx)
    cy = coord_coeffs(ry)
    cz = coord_coeffs(rz)
    ct = _uniform_fd_coeffs(diff_a.astype(jnp.float32), diff_b.astype(jnp.float32),
                            a_valid, b_valid, interior, 1.0 / STEP_SECONDS)

    # ---- field components (leading component axis -> cheap plane reads) ------
    Bx, By, Bz = B_ref[0], B_ref[1], B_ref[2]
    Ex, Ey, Ez = E_ref[0], E_ref[1], E_ref[2]
    vx, vy, vz = v_ref[0], v_ref[1], v_ref[2]
    vdx, vdy, vdz = vd_ref[0], vd_ref[1], vd_ref[2]
    Jx, Jy, Jz = J_ref[0], J_ref[1], J_ref[2]
    rho = rho_ref[...]
    p = p_ref[...]
    sigma = sigma_ref[...]

    # Shifted copies of B shared by the 9 spatial + 3 time gradients.
    Bx_s, By_s, Bz_s = _shift_pair(Bx), _shift_pair(By), _shift_pair(Bz)

    # 1) Gauss law of magnetism: div(B, r).mean()
    dBx_dx = _grad(cx, Bx, Bx_s); dBx_dy = _grad(cy, Bx, Bx_s); dBx_dz = _grad(cz, Bx, Bx_s)
    dBy_dx = _grad(cx, By, By_s); dBy_dy = _grad(cy, By, By_s); dBy_dz = _grad(cz, By, By_s)
    dBz_dx = _grad(cx, Bz, Bz_s); dBz_dy = _grad(cy, Bz, Bz_s); dBz_dz = _grad(cz, Bz, Bz_s)
    s1 = jnp.sum(dBx_dx + dBy_dy + dBz_dz)

    # 2) Gauss law (electrostatic): (div(E, r) - sigma / eps0).mean()
    # TODO(synk): reference calc.div indexes position[:, dim] (a (batch,3) slab);
    # the physically-intended position[:, :, dim] spacing is used here.
    div_E = (_grad(cx, Ex, _shift_pair(Ex))
             + _grad(cy, Ey, _shift_pair(Ey))
             + _grad(cz, Ez, _shift_pair(Ez)))
    s2 = jnp.sum(div_E - sigma * INV_EPSILON_0)

    # 3) Drift velocity: (cross(E, B) / sum(B, -1, keepdim) - v_drift).mean()
    cEBx = Ey * Bz - Ez * By
    cEBy = Ez * Bx - Ex * Bz
    cEBz = Ex * By - Ey * Bx
    inv_bsum = 1.0 / (Bx + By + Bz)               # single divide, reused 3x
    s3 = jnp.sum((cEBx + cEBy + cEBz) * inv_bsum - (vdx + vdy + vdz))

    # 4) Continuity: ((d rho / dt + div(rho * v, r)) ** 2).mean()
    # TODO(synk): reference calls calc.dF_dt on a 2-D rho (dim=-2 == batch axis)
    # and broadcasts rho (B,S) against v (B,S,3); the physical time (seq) axis
    # and rho[..., None] * v are used here instead.
    rvx, rvy, rvz = rho * vx, rho * vy, rho * vz
    res4 = (_grad(ct, rho, _shift_pair(rho))
            + _grad(cx, rvx, _shift_pair(rvx))
            + _grad(cy, rvy, _shift_pair(rvy))
            + _grad(cz, rvz, _shift_pair(rvz)))
    s4 = jnp.sum(res4 * res4)

    # 5) State: (d(p / rho**2.5) / dt) ** 2 .mean(); gamma = (3 + 2) / 2
    q = p / (rho * rho * jnp.sqrt(rho))           # rho**2.5 without pow (exp+log)
    dq_dt = _grad(ct, q, _shift_pair(q))
    s5 = jnp.sum(dq_dt * dq_dt)

    # 6) Ohm: ((E + cross(v, B)) ** 2).mean()
    cvBx = vy * Bz - vz * By
    cvBy = vz * Bx - vx * Bz
    cvBz = vx * By - vy * Bx
    o6x, o6y, o6z = Ex + cvBx, Ey + cvBy, Ez + cvBz
    s6 = jnp.sum(o6x * o6x + o6y * o6y + o6z * o6z)

    # 7) Induction: ((dB/dt - rot(cross(v, B), r)) ** 2).mean()
    cvBx_s, cvBy_s, cvBz_s = _shift_pair(cvBx), _shift_pair(cvBy), _shift_pair(cvBz)
    i7x = _grad(ct, Bx, Bx_s) - (_grad(cy, cvBz, cvBz_s) - _grad(cz, cvBy, cvBy_s))
    i7y = _grad(ct, By, By_s) - (_grad(cz, cvBx, cvBx_s) - _grad(cx, cvBz, cvBz_s))
    i7z = _grad(ct, Bz, Bz_s) - (_grad(cx, cvBy, cvBy_s) - _grad(cy, cvBx, cvBx_s))
    s7 = jnp.sum(i7x * i7x + i7y * i7y + i7z * i7z)

    # 8) Motion: ((cross(J,B) - (B.grad)B/mu0 + grad(|B|^2/(2 mu0))) ** 2).mean()
    cJBx = Jy * Bz - Jz * By
    cJBy = Jz * Bx - Jx * Bz
    cJBz = Jx * By - Jy * Bx
    conv_x = Bx * dBx_dx + By * dBx_dy + Bz * dBx_dz
    conv_y = Bx * dBy_dx + By * dBy_dy + Bz * dBy_dz
    conv_z = Bx * dBz_dx + By * dBz_dy + Bz * dBz_dz
    P = (Bx * Bx + By * By + Bz * Bz) * (0.5 * INV_MU_0)
    P_s = _shift_pair(P)
    m8x = cJBx - conv_x * INV_MU_0 + _grad(cx, P, P_s)
    m8y = cJBy - conv_y * INV_MU_0 + _grad(cy, P, P_s)
    m8z = cJBz - conv_z * INV_MU_0 + _grad(cz, P, P_s)
    s8 = jnp.sum(m8x * m8x + m8y * m8y + m8z * m8z)

    # ---- accumulate this batch-tile's partials into the resident SMEM output -
    out_ref[0] = out_ref[0] + s1 * inv_n
    out_ref[1] = out_ref[1] + s2 * inv_n
    out_ref[2] = out_ref[2] + s3 * inv_3n
    out_ref[3] = out_ref[3] + s4 * inv_n
    out_ref[4] = out_ref[4] + s5 * inv_n
    out_ref[5] = out_ref[5] + s6 * inv_3n
    out_ref[6] = out_ref[6] + s7 * inv_3n
    out_ref[7] = out_ref[7] + s8 * inv_3n


def _pick_batch_tile(batch, seq, max_plane_elems=32 * 1024):
    """Whole batch if one (batch, seq) plane fits the per-tile budget; otherwise
    the largest divisor of `batch` that is a multiple of 8 and within budget.
    Budget keeps ~21 double-buffered f32 input planes well under the VMEM limit
    while leaving headroom for the elementwise intermediates."""
    if batch * seq <= max_plane_elems:
        return batch
    cap = min(batch, max(8, (max_plane_elems // max(seq, 1)) // 8 * 8))
    for bt in range(cap - cap % 8, 0, -8):
        if bt and batch % bt == 0:
            return bt
    return batch  # no sublane-aligned divisor; fall back to the whole batch


def ideal_mhd_losses(B, E, v, v_drift, J, r, rho, p, sigma):
    """Inputs in PyTorch layout: vector fields (batch, seq, 3), scalars (batch, seq).

    Returns an (8,) float32 vector:
      [GaussMagnetism, GaussElectrostatic, DriftVelocity, Continuity,
       State, Ohm, Induction, Motion]
    """
    batch, seq = rho.shape
    if seq < 3:
        raise ValueError("sequence length must be >= 3 for the FD stencil")

    bt = _pick_batch_tile(batch, seq)
    grid = (batch // bt,)

    def to3(x):
        # glue: one fused cast+transpose per field to (3, batch, seq) so the
        # component axis leads, batch sits on sublanes and seq (FD axis) on
        # lanes.  Storing fields in this layout upstream would remove this
        # extra HBM round trip entirely.
        return jnp.transpose(x.astype(jnp.float32), (2, 0, 1))

    vec_spec = pl.BlockSpec((3, bt, seq), lambda i: (0, i, 0))
    sca_spec = pl.BlockSpec((bt, seq), lambda i: (i, 0))
    out_spec = pl.BlockSpec((8,), lambda i: (0,),
                            memory_space=pltpu.MemorySpace.SMEM)

    kernel = functools.partial(_ideal_mhd_kernel,
                               inv_n=1.0 / float(batch * seq),
                               inv_3n=1.0 / float(3 * batch * seq))

    return pl.pallas_call(
        kernel,
        out_shape=jax.ShapeDtypeStruct((8,), jnp.float32),
        grid=grid,
        in_specs=[vec_spec] * 6 + [sca_spec] * 3,
        out_specs=out_spec,
        compiler_params=pltpu.CompilerParams(
            # The batch-tile axis accumulates into the shared SMEM output, so it
            # is "arbitrary"; per-core partial outputs would be required to mark
            # it "parallel" for v7x's two TensorCores.
            dimension_semantics=("arbitrary",),
            vmem_limit_bytes=32 * 1024 * 1024,
        ),
    )(to3(B), to3(E), to3(v), to3(v_drift), to3(J), to3(r),
      rho.astype(jnp.float32), p.astype(jnp.float32), sigma.astype(jnp.float32))


if __name__ == "__main__":
    key = jax.random.PRNGKey(0)
    batch, seq = 2, 8
    ks = jax.random.split(key, 9)

    B = jax.random.normal(ks[0], (batch, seq, 3), jnp.float32)
    E = jax.random.normal(ks[1], (batch, seq, 3), jnp.float32)
    v = jax.random.normal(ks[2], (batch, seq, 3), jnp.float32)
    v_drift = jax.random.normal(ks[3], (batch, seq, 3), jnp.float32)
    J = jax.random.normal(ks[4], (batch, seq, 3), jnp.float32)
    # monotone spacecraft trajectory so finite-difference spacings are well conditioned
    base = jnp.arange(seq, dtype=jnp.float32)[None, :, None]
    r = base + 0.1 * jax.random.uniform(ks[5], (batch, seq, 3), jnp.float32)
    rho = 1.0 + jax.random.uniform(ks[6], (batch, seq), jnp.float32)
    p = 1.0 + jax.random.uniform(ks[7], (batch, seq), jnp.float32)
    sigma = jax.random.normal(ks[8], (batch, seq), jnp.float32) * EPSILON_0

    losses = ideal_mhd_losses(B, E, v, v_drift, J, r, rho, p, sigma)
    jax.block_until_ready(losses)
    print("KERNEL_OK")
</pallas_src>

<mosaic_0001>
module attributes {stable_mosaic.version = 11 : i64} {
  func.func @_ideal_mhd_kernel(%arg0: i32, %arg1: memref<3x2x8xf32, #tpu.memory_space<vmem>>, %arg2: memref<3x2x8xf32, #tpu.memory_space<vmem>>, %arg3: memref<3x2x8xf32, #tpu.memory_space<vmem>>, %arg4: memref<3x2x8xf32, #tpu.memory_space<vmem>>, %arg5: memref<3x2x8xf32, #tpu.memory_space<vmem>>, %arg6: memref<3x2x8xf32, #tpu.memory_space<vmem>>, %arg7: memref<2x8xf32, #tpu.memory_space<vmem>>, %arg8: memref<2x8xf32, #tpu.memory_space<vmem>>, %arg9: memref<2x8xf32, #tpu.memory_space<vmem>>, %arg10: memref<8xf32, #tpu.memory_space<smem>>) attributes {dimension_semantics = [#tpu.dimension_semantics<arbitrary>], iteration_bounds = array<i64: 1>, scalar_prefetch = 0 : i64, scratch_operands = 0 : i64, tpu.core_type = #tpu.core_type<tc>, window_params = [{transform_indices = @transform_0, window_bounds = array<i64: 3, 2, 8>}, {transform_indices = @transform_1, window_bounds = array<i64: 3, 2, 8>}, {transform_indices = @transform_2, window_bounds = array<i64: 3, 2, 8>}, {transform_indices = @transform_3, window_bounds = array<i64: 3, 2, 8>}, {transform_indices = @transform_4, window_bounds = array<i64: 3, 2, 8>}, {transform_indices = @transform_5, window_bounds = array<i64: 3, 2, 8>}, {transform_indices = @transform_6, window_bounds = array<i64: 2, 8>}, {transform_indices = @transform_7, window_bounds = array<i64: 2, 8>}, {transform_indices = @transform_8, window_bounds = array<i64: 2, 8>}, {transform_indices = @transform_9, window_bounds = array<i64: 8>}]} {
    %c0_i32 = arith.constant 0 : i32
    %0 = arith.cmpi eq, %arg0, %c0_i32 : i32
    %1 = arith.extui %0 : i1 to i32
    %c0_i32_0 = arith.constant 0 : i32
    %2 = arith.cmpi ne, %1, %c0_i32_0 : i32
    scf.if %2 {
      %cst_153 = arith.constant 0.000000e+00 : f32
      %c0_154 = arith.constant 0 : index
      %505 = memref.load %arg10[%c0_154] : memref<8xf32, #tpu.memory_space<smem>>
      memref.store %cst_153, %arg10[%c0_154] : memref<8xf32, #tpu.memory_space<smem>>
      %cst_155 = arith.constant 0.000000e+00 : f32
      %c1_156 = arith.constant 1 : index
      %506 = memref.load %arg10[%c1_156] : memref<8xf32, #tpu.memory_space<smem>>
      memref.store %cst_155, %arg10[%c1_156] : memref<8xf32, #tpu.memory_space<smem>>
      %cst_157 = arith.constant 0.000000e+00 : f32
      %c2_158 = arith.constant 2 : index
      %507 = memref.load %arg10[%c2_158] : memref<8xf32, #tpu.memory_space<smem>>
      memref.store %cst_157, %arg10[%c2_158] : memref<8xf32, #tpu.memory_space<smem>>
      %cst_159 = arith.constant 0.000000e+00 : f32
      %c3_160 = arith.constant 3 : index
      %508 = memref.load %arg10[%c3_160] : memref<8xf32, #tpu.memory_space<smem>>
      memref.store %cst_159, %arg10[%c3_160] : memref<8xf32, #tpu.memory_space<smem>>
      %cst_161 = arith.constant 0.000000e+00 : f32
      %c4_162 = arith.constant 4 : index
      %509 = memref.load %arg10[%c4_162] : memref<8xf32, #tpu.memory_space<smem>>
      memref.store %cst_161, %arg10[%c4_162] : memref<8xf32, #tpu.memory_space<smem>>
      %cst_163 = arith.constant 0.000000e+00 : f32
      %c5_164 = arith.constant 5 : index
      %510 = memref.load %arg10[%c5_164] : memref<8xf32, #tpu.memory_space<smem>>
      memref.store %cst_163, %arg10[%c5_164] : memref<8xf32, #tpu.memory_space<smem>>
      %cst_165 = arith.constant 0.000000e+00 : f32
      %c6_166 = arith.constant 6 : index
      %511 = memref.load %arg10[%c6_166] : memref<8xf32, #tpu.memory_space<smem>>
      memref.store %cst_165, %arg10[%c6_166] : memref<8xf32, #tpu.memory_space<smem>>
      %cst_167 = arith.constant 0.000000e+00 : f32
      %c7_168 = arith.constant 7 : index
      %512 = memref.load %arg10[%c7_168] : memref<8xf32, #tpu.memory_space<smem>>
      memref.store %cst_167, %arg10[%c7_168] : memref<8xf32, #tpu.memory_space<smem>>
    } else {
    }
    %3 = tpu.iota {dimensions = array<i32: 1>} : vector<2x8xi32>
    %c1_i32 = arith.constant 1 : i32
    %4 = tpu.dynamic_rotate %3 by %c1_i32 dim 1 : vector<2x8xi32>, i32 -> vector<2x8xi32>
    %c7_i32 = arith.constant 7 : i32
    %5 = tpu.dynamic_rotate %3 by %c7_i32 dim 1 : vector<2x8xi32>, i32 -> vector<2x8xi32>
    %6 = arith.subi %4, %3 : vector<2x8xi32>
    %7 = arith.subi %5, %3 : vector<2x8xi32>
    %8 = arith.muli %6, %6 : vector<2x8xi32>
    %c1_i32_1 = arith.constant 1 : i32
    %9 = vector.broadcast %c1_i32_1 : i32 to vector<2x8xi32>
    %10 = arith.cmpi eq, %8, %9 : vector<2x8xi32>
    %11 = arith.muli %7, %7 : vector<2x8xi32>
    %c1_i32_2 = arith.constant 1 : i32
    %12 = vector.broadcast %c1_i32_2 : i32 to vector<2x8xi32>
    %13 = arith.cmpi eq, %11, %12 : vector<2x8xi32>
    %14 = arith.andi %10, %13 : vector<2x8xi1>
    %c0 = arith.constant 0 : index
    %c0_3 = arith.constant 0 : index
    %c0_4 = arith.constant 0 : index
    %15 = vector.load %arg6[%c0, %c0_3, %c0_4] : memref<3x2x8xf32, #tpu.memory_space<vmem>>, vector<1x2x8xf32>
    %16 = vector.shape_cast %15 : vector<1x2x8xf32> to vector<2x8xf32>
    %c1 = arith.constant 1 : index
    %c0_5 = arith.constant 0 : index
    %c0_6 = arith.constant 0 : index
    %17 = vector.load %arg6[%c1, %c0_5, %c0_6] : memref<3x2x8xf32, #tpu.memory_space<vmem>>, vector<1x2x8xf32>
    %18 = vector.shape_cast %17 : vector<1x2x8xf32> to vector<2x8xf32>
    %c2 = arith.constant 2 : index
    %c0_7 = arith.constant 0 : index
    %c0_8 = arith.constant 0 : index
    %19 = vector.load %arg6[%c2, %c0_7, %c0_8] : memref<3x2x8xf32, #tpu.memory_space<vmem>>, vector<1x2x8xf32>
    %20 = vector.shape_cast %19 : vector<1x2x8xf32> to vector<2x8xf32>
    %c1_i32_9 = arith.constant 1 : i32
    %21 = tpu.dynamic_rotate %16 by %c1_i32_9 dim 1 : vector<2x8xf32>, i32 -> vector<2x8xf32>
    %c7_i32_10 = arith.constant 7 : i32
    %22 = tpu.dynamic_rotate %16 by %c7_i32_10 dim 1 : vector<2x8xf32>, i32 -> vector<2x8xf32>
    %23 = arith.subf %21, %16 : vector<2x8xf32>
    %24 = arith.subf %22, %16 : vector<2x8xf32>
    %25 = arith.mulf %23, %24 : vector<2x8xf32>
    %26 = arith.subf %24, %23 : vector<2x8xf32>
    %27 = arith.mulf %25, %26 : vector<2x8xf32>
    %cst = arith.constant 1.000000e+00 : f32
    %28 = vector.broadcast %cst : f32 to vector<2x8xf32>
    %29 = arith.divf %28, %27 : vector<2x8xf32>
    %30 = arith.mulf %24, %24 : vector<2x8xf32>
    %31 = arith.mulf %30, %29 : vector<2x8xf32>
    %32 = arith.mulf %23, %23 : vector<2x8xf32>
    %cst_11 = arith.constant 0.000000e+00 : f32
    %33 = vector.broadcast %cst_11 : f32 to vector<2x8xf32>
    %34 = arith.subf %33, %32 : vector<2x8xf32>
    %35 = arith.mulf %34, %29 : vector<2x8xf32>
    %36 = arith.select %10, %23, %24 : vector<2x8xi1>, vector<2x8xf32>
    %cst_12 = arith.constant 1.000000e+00 : f32
    %37 = vector.broadcast %cst_12 : f32 to vector<2x8xf32>
    %38 = arith.divf %37, %36 : vector<2x8xf32>
    %cst_13 = arith.constant 0.000000e+00 : f32
    %39 = vector.broadcast %cst_13 : f32 to vector<2x8xf32>
    %40 = arith.select %10, %38, %39 : vector<2x8xi1>, vector<2x8xf32>
    %41 = arith.select %14, %31, %40 : vector<2x8xi1>, vector<2x8xf32>
    %cst_14 = arith.constant 0.000000e+00 : f32
    %42 = vector.broadcast %cst_14 : f32 to vector<2x8xf32>
    %43 = arith.select %13, %38, %42 : vector<2x8xi1>, vector<2x8xf32>
    %44 = arith.select %14, %35, %43 : vector<2x8xi1>, vector<2x8xf32>
    %45 = arith.addf %41, %44 : vector<2x8xf32>
    %cst_15 = arith.constant 0.000000e+00 : f32
    %46 = vector.broadcast %cst_15 : f32 to vector<2x8xf32>
    %47 = arith.subf %46, %45 : vector<2x8xf32>
    %c1_i32_16 = arith.constant 1 : i32
    %48 = tpu.dynamic_rotate %18 by %c1_i32_16 dim 1 : vector<2x8xf32>, i32 -> vector<2x8xf32>
    %c7_i32_17 = arith.constant 7 : i32
    %49 = tpu.dynamic_rotate %18 by %c7_i32_17 dim 1 : vector<2x8xf32>, i32 -> vector<2x8xf32>
    %50 = arith.subf %48, %18 : vector<2x8xf32>
    %51 = arith.subf %49, %18 : vector<2x8xf32>
    %52 = arith.mulf %50, %51 : vector<2x8xf32>
    %53 = arith.subf %51, %50 : vector<2x8xf32>
    %54 = arith.mulf %52, %53 : vector<2x8xf32>
    %cst_18 = arith.constant 1.000000e+00 : f32
    %55 = vector.broadcast %cst_18 : f32 to vector<2x8xf32>
    %56 = arith.divf %55, %54 : vector<2x8xf32>
    %57 = arith.mulf %51, %51 : vector<2x8xf32>
    %58 = arith.mulf %57, %56 : vector<2x8xf32>
    %59 = arith.mulf %50, %50 : vector<2x8xf32>
    %cst_19 = arith.constant 0.000000e+00 : f32
    %60 = vector.broadcast %cst_19 : f32 to vector<2x8xf32>
    %61 = arith.subf %60, %59 : vector<2x8xf32>
    %62 = arith.mulf %61, %56 : vector<2x8xf32>
    %63 = arith.select %10, %50, %51 : vector<2x8xi1>, vector<2x8xf32>
    %cst_20 = arith.constant 1.000000e+00 : f32
    %64 = vector.broadcast %cst_20 : f32 to vector<2x8xf32>
    %65 = arith.divf %64, %63 : vector<2x8xf32>
    %cst_21 = arith.constant 0.000000e+00 : f32
    %66 = vector.broadcast %cst_21 : f32 to vector<2x8xf32>
    %67 = arith.select %10, %65, %66 : vector<2x8xi1>, vector<2x8xf32>
    %68 = arith.select %14, %58, %67 : vector<2x8xi1>, vector<2x8xf32>
    %cst_22 = arith.constant 0.000000e+00 : f32
    %69 = vector.broadcast %cst_22 : f32 to vector<2x8xf32>
    %70 = arith.select %13, %65, %69 : vector<2x8xi1>, vector<2x8xf32>
    %71 = arith.select %14, %62, %70 : vector<2x8xi1>, vector<2x8xf32>
    %72 = arith.addf %68, %71 : vector<2x8xf32>
    %cst_23 = arith.constant 0.000000e+00 : f32
    %73 = vector.broadcast %cst_23 : f32 to vector<2x8xf32>
    %74 = arith.subf %73, %72 : vector<2x8xf32>
    %c1_i32_24 = arith.constant 1 : i32
    %75 = tpu.dynamic_rotate %20 by %c1_i32_24 dim 1 : vector<2x8xf32>, i32 -> vector<2x8xf32>
    %c7_i32_25 = arith.constant 7 : i32
    %76 = tpu.dynamic_rotate %20 by %c7_i32_25 dim 1 : vector<2x8xf32>, i32 -> vector<2x8xf32>
    %77 = arith.subf %75, %20 : vector<2x8xf32>
    %78 = arith.subf %76, %20 : vector<2x8xf32>
    %79 = arith.mulf %77, %78 : vector<2x8xf32>
    %80 = arith.subf %78, %77 : vector<2x8xf32>
    %81 = arith.mulf %79, %80 : vector<2x8xf32>
    %cst_26 = arith.constant 1.000000e+00 : f32
    %82 = vector.broadcast %cst_26 : f32 to vector<2x8xf32>
    %83 = arith.divf %82, %81 : vector<2x8xf32>
    %84 = arith.mulf %78, %78 : vector<2x8xf32>
    %85 = arith.mulf %84, %83 : vector<2x8xf32>
    %86 = arith.mulf %77, %77 : vector<2x8xf32>
    %cst_27 = arith.constant 0.000000e+00 : f32
    %87 = vector.broadcast %cst_27 : f32 to vector<2x8xf32>
    %88 = arith.subf %87, %86 : vector<2x8xf32>
    %89 = arith.mulf %88, %83 : vector<2x8xf32>
    %90 = arith.select %10, %77, %78 : vector<2x8xi1>, vector<2x8xf32>
    %cst_28 = arith.constant 1.000000e+00 : f32
    %91 = vector.broadcast %cst_28 : f32 to vector<2x8xf32>
    %92 = arith.divf %91, %90 : vector<2x8xf32>
    %cst_29 = arith.constant 0.000000e+00 : f32
    %93 = vector.broadcast %cst_29 : f32 to vector<2x8xf32>
    %94 = arith.select %10, %92, %93 : vector<2x8xi1>, vector<2x8xf32>
    %95 = arith.select %14, %85, %94 : vector<2x8xi1>, vector<2x8xf32>
    %cst_30 = arith.constant 0.000000e+00 : f32
    %96 = vector.broadcast %cst_30 : f32 to vector<2x8xf32>
    %97 = arith.select %13, %92, %96 : vector<2x8xi1>, vector<2x8xf32>
    %98 = arith.select %14, %89, %97 : vector<2x8xi1>, vector<2x8xf32>
    %99 = arith.addf %95, %98 : vector<2x8xf32>
    %cst_31 = arith.constant 0.000000e+00 : f32
    %100 = vector.broadcast %cst_31 : f32 to vector<2x8xf32>
    %101 = arith.subf %100, %99 : vector<2x8xf32>
    %102 = arith.sitofp %6 : vector<2x8xi32> to vector<2x8xf32>
    %103 = arith.sitofp %7 : vector<2x8xi32> to vector<2x8xf32>
    %cst_32 = arith.constant 0.00333333341 : f32
    %cst_33 = arith.constant 0.000000e+00 : f32
    %104 = vector.broadcast %cst_32 : f32 to vector<2x8xf32>
    %105 = vector.broadcast %cst_33 : f32 to vector<2x8xf32>
    %106 = arith.select %10, %104, %105 : vector<2x8xi1>, vector<2x8xf32>
    %cst_34 = arith.constant 0.00166666671 : f32
    %107 = vector.broadcast %cst_34 : f32 to vector<2x8xf32>
    %108 = arith.select %14, %107, %106 : vector<2x8xi1>, vector<2x8xf32>
    %109 = arith.mulf %102, %108 : vector<2x8xf32>
    %cst_35 = arith.constant 0.00333333341 : f32
    %cst_36 = arith.constant 0.000000e+00 : f32
    %110 = vector.broadcast %cst_35 : f32 to vector<2x8xf32>
    %111 = vector.broadcast %cst_36 : f32 to vector<2x8xf32>
    %112 = arith.select %13, %110, %111 : vector<2x8xi1>, vector<2x8xf32>
    %cst_37 = arith.constant 0.00166666671 : f32
    %113 = vector.broadcast %cst_37 : f32 to vector<2x8xf32>
    %114 = arith.select %14, %113, %112 : vector<2x8xi1>, vector<2x8xf32>
    %115 = arith.mulf %103, %114 : vector<2x8xf32>
    %116 = arith.addf %109, %115 : vector<2x8xf32>
    %cst_38 = arith.constant 0.000000e+00 : f32
    %117 = vector.broadcast %cst_38 : f32 to vector<2x8xf32>
    %118 = arith.subf %117, %116 : vector<2x8xf32>
    %c0_39 = arith.constant 0 : index
    %c0_40 = arith.constant 0 : index
    %c0_41 = arith.constant 0 : index
    %119 = vector.load %arg1[%c0_39, %c0_40, %c0_41] : memref<3x2x8xf32, #tpu.memory_space<vmem>>, vector<1x2x8xf32>
    %120 = vector.shape_cast %119 : vector<1x2x8xf32> to vector<2x8xf32>
    %c1_42 = arith.constant 1 : index
    %c0_43 = arith.constant 0 : index
    %c0_44 = arith.constant 0 : index
    %121 = vector.load %arg1[%c1_42, %c0_43, %c0_44] : memref<3x2x8xf32, #tpu.memory_space<vmem>>, vector<1x2x8xf32>
    %122 = vector.shape_cast %121 : vector<1x2x8xf32> to vector<2x8xf32>
    %c2_45 = arith.constant 2 : index
    %c0_46 = arith.constant 0 : index
    %c0_47 = arith.constant 0 : index
    %123 = vector.load %arg1[%c2_45, %c0_46, %c0_47] : memref<3x2x8xf32, #tpu.memory_space<vmem>>, vector<1x2x8xf32>
    %124 = vector.shape_cast %123 : vector<1x2x8xf32> to vector<2x8xf32>
    %c0_48 = arith.constant 0 : index
    %c0_49 = arith.constant 0 : index
    %c0_50 = arith.constant 0 : index
    %125 = vector.load %arg2[%c0_48, %c0_49, %c0_50] : memref<3x2x8xf32, #tpu.memory_space<vmem>>, vector<1x2x8xf32>
    %126 = vector.shape_cast %125 : vector<1x2x8xf32> to vector<2x8xf32>
    %c1_51 = arith.constant 1 : index
    %c0_52 = arith.constant 0 : index
    %c0_53 = arith.constant 0 : index
    %127 = vector.load %arg2[%c1_51, %c0_52, %c0_53] : memref<3x2x8xf32, #tpu.memory_space<vmem>>, vector<1x2x8xf32>
    %128 = vector.shape_cast %127 : vector<1x2x8xf32> to vector<2x8xf32>
    %c2_54 = arith.constant 2 : index
    %c0_55 = arith.constant 0 : index
    %c0_56 = arith.constant 0 : index
    %129 = vector.load %arg2[%c2_54, %c0_55, %c0_56] : memref<3x2x8xf32, #tpu.memory_space<vmem>>, vector<1x2x8xf32>
    %130 = vector.shape_cast %129 : vector<1x2x8xf32> to vector<2x8xf32>
    %c0_57 = arith.constant 0 : index
    %c0_58 = arith.constant 0 : index
    %c0_59 = arith.constant 0 : index
    %131 = vector.load %arg3[%c0_57, %c0_58, %c0_59] : memref<3x2x8xf32, #tpu.memory_space<vmem>>, vector<1x2x8xf32>
    %132 = vector.shape_cast %131 : vector<1x2x8xf32> to vector<2x8xf32>
    %c1_60 = arith.constant 1 : index
    %c0_61 = arith.constant 0 : index
    %c0_62 = arith.constant 0 : index
    %133 = vector.load %arg3[%c1_60, %c0_61, %c0_62] : memref<3x2x8xf32, #tpu.memory_space<vmem>>, vector<1x2x8xf32>
    %134 = vector.shape_cast %133 : vector<1x2x8xf32> to vector<2x8xf32>
    %c2_63 = arith.constant 2 : index
    %c0_64 = arith.constant 0 : index
    %c0_65 = arith.constant 0 : index
    %135 = vector.load %arg3[%c2_63, %c0_64, %c0_65] : memref<3x2x8xf32, #tpu.memory_space<vmem>>, vector<1x2x8xf32>
    %136 = vector.shape_cast %135 : vector<1x2x8xf32> to vector<2x8xf32>
    %c0_66 = arith.constant 0 : index
    %c0_67 = arith.constant 0 : index
    %c0_68 = arith.constant 0 : index
    %137 = vector.load %arg4[%c0_66, %c0_67, %c0_68] : memref<3x2x8xf32, #tpu.memory_space<vmem>>, vector<1x2x8xf32>
    %138 = vector.shape_cast %137 : vector<1x2x8xf32> to vector<2x8xf32>
    %c1_69 = arith.constant 1 : index
    %c0_70 = arith.constant 0 : index
    %c0_71 = arith.constant 0 : index
    %139 = vector.load %arg4[%c1_69, %c0_70, %c0_71] : memref<3x2x8xf32, #tpu.memory_space<vmem>>, vector<1x2x8xf32>
    %140 = vector.shape_cast %139 : vector<1x2x8xf32> to vector<2x8xf32>
    %c2_72 = arith.constant 2 : index
    %c0_73 = arith.constant 0 : index
    %c0_74 = arith.constant 0 : index
    %141 = vector.load %arg4[%c2_72, %c0_73, %c0_74] : memref<3x2x8xf32, #tpu.memory_space<vmem>>, vector<1x2x8xf32>
    %142 = vector.shape_cast %141 : vector<1x2x8xf32> to vector<2x8xf32>
    %c0_75 = arith.constant 0 : index
    %c0_76 = arith.constant 0 : index
    %c0_77 = arith.constant 0 : index
    %143 = vector.load %arg5[%c0_75, %c0_76, %c0_77] : memref<3x2x8xf32, #tpu.memory_space<vmem>>, vector<1x2x8xf32>
    %144 = vector.shape_cast %143 : vector<1x2x8xf32> to vector<2x8xf32>
    %c1_78 = arith.constant 1 : index
    %c0_79 = arith.constant 0 : index
    %c0_80 = arith.constant 0 : index
    %145 = vector.load %arg5[%c1_78, %c0_79, %c0_80] : memref<3x2x8xf32, #tpu.memory_space<vmem>>, vector<1x2x8xf32>
    %146 = vector.shape_cast %145 : vector<1x2x8xf32> to vector<2x8xf32>
    %c2_81 = arith.constant 2 : index
    %c0_82 = arith.constant 0 : index
    %c0_83 = arith.constant 0 : index
    %147 = vector.load %arg5[%c2_81, %c0_82, %c0_83] : memref<3x2x8xf32, #tpu.memory_space<vmem>>, vector<1x2x8xf32>
    %148 = vector.shape_cast %147 : vector<1x2x8xf32> to vector<2x8xf32>
    %c0_84 = arith.constant 0 : index
    %c0_85 = arith.constant 0 : index
    %149 = vector.load %arg7[%c0_84, %c0_85] : memref<2x8xf32, #tpu.memory_space<vmem>>, vector<2x8xf32>
    %c0_86 = arith.constant 0 : index
    %c0_87 = arith.constant 0 : index
    %150 = vector.load %arg8[%c0_86, %c0_87] : memref<2x8xf32, #tpu.memory_space<vmem>>, vector<2x8xf32>
    %c0_88 = arith.constant 0 : index
    %c0_89 = arith.constant 0 : index
    %151 = vector.load %arg9[%c0_88, %c0_89] : memref<2x8xf32, #tpu.memory_space<vmem>>, vector<2x8xf32>
    %c1_i32_90 = arith.constant 1 : i32
    %152 = tpu.dynamic_rotate %120 by %c1_i32_90 dim 1 : vector<2x8xf32>, i32 -> vector<2x8xf32>
    %c7_i32_91 = arith.constant 7 : i32
    %153 = tpu.dynamic_rotate %120 by %c7_i32_91 dim 1 : vector<2x8xf32>, i32 -> vector<2x8xf32>
    %c1_i32_92 = arith.constant 1 : i32
    %154 = tpu.dynamic_rotate %122 by %c1_i32_92 dim 1 : vector<2x8xf32>, i32 -> vector<2x8xf32>
    %c7_i32_93 = arith.constant 7 : i32
    %155 = tpu.dynamic_rotate %122 by %c7_i32_93 dim 1 : vector<2x8xf32>, i32 -> vector<2x8xf32>
    %c1_i32_94 = arith.constant 1 : i32
    %156 = tpu.dynamic_rotate %124 by %c1_i32_94 dim 1 : vector<2x8xf32>, i32 -> vector<2x8xf32>
    %c7_i32_95 = arith.constant 7 : i32
    %157 = tpu.dynamic_rotate %124 by %c7_i32_95 dim 1 : vector<2x8xf32>, i32 -> vector<2x8xf32>
    %158 = arith.mulf %41, %152 : vector<2x8xf32>
    %159 = arith.mulf %47, %120 : vector<2x8xf32>
    %160 = arith.addf %158, %159 : vector<2x8xf32>
    %161 = arith.mulf %44, %153 : vector<2x8xf32>
    %162 = arith.addf %160, %161 : vector<2x8xf32>
    %163 = arith.mulf %68, %152 : vector<2x8xf32>
    %164 = arith.mulf %74, %120 : vector<2x8xf32>
    %165 = arith.addf %163, %164 : vector<2x8xf32>
    %166 = arith.mulf %71, %153 : vector<2x8xf32>
    %167 = arith.addf %165, %166 : vector<2x8xf32>
    %168 = arith.mulf %95, %152 : vector<2x8xf32>
    %169 = arith.mulf %101, %120 : vector<2x8xf32>
    %170 = arith.addf %168, %169 : vector<2x8xf32>
    %171 = arith.mulf %98, %153 : vector<2x8xf32>
    %172 = arith.addf %170, %171 : vector<2x8xf32>
    %173 = arith.mulf %41, %154 : vector<2x8xf32>
    %174 = arith.mulf %47, %122 : vector<2x8xf32>
    %175 = arith.addf %173, %174 : vector<2x8xf32>
    %176 = arith.mulf %44, %155 : vector<2x8xf32>
    %177 = arith.addf %175, %176 : vector<2x8xf32>
    %178 = arith.mulf %68, %154 : vector<2x8xf32>
    %179 = arith.mulf %74, %122 : vector<2x8xf32>
    %180 = arith.addf %178, %179 : vector<2x8xf32>
    %181 = arith.mulf %71, %155 : vector<2x8xf32>
    %182 = arith.addf %180, %181 : vector<2x8xf32>
    %183 = arith.mulf %95, %154 : vector<2x8xf32>
    %184 = arith.mulf %101, %122 : vector<2x8xf32>
    %185 = arith.addf %183, %184 : vector<2x8xf32>
    %186 = arith.mulf %98, %155 : vector<2x8xf32>
    %187 = arith.addf %185, %186 : vector<2x8xf32>
    %188 = arith.mulf %41, %156 : vector<2x8xf32>
    %189 = arith.mulf %47, %124 : vector<2x8xf32>
    %190 = arith.addf %188, %189 : vector<2x8xf32>
    %191 = arith.mulf %44, %157 : vector<2x8xf32>
    %192 = arith.addf %190, %191 : vector<2x8xf32>
    %193 = arith.mulf %68, %156 : vector<2x8xf32>
    %194 = arith.mulf %74, %124 : vector<2x8xf32>
    %195 = arith.addf %193, %194 : vector<2x8xf32>
    %196 = arith.mulf %71, %157 : vector<2x8xf32>
    %197 = arith.addf %195, %196 : vector<2x8xf32>
    %198 = arith.mulf %95, %156 : vector<2x8xf32>
    %199 = arith.mulf %101, %124 : vector<2x8xf32>
    %200 = arith.addf %198, %199 : vector<2x8xf32>
    %201 = arith.mulf %98, %157 : vector<2x8xf32>
    %202 = arith.addf %200, %201 : vector<2x8xf32>
    %203 = arith.addf %162, %182 : vector<2x8xf32>
    %204 = arith.addf %203, %202 : vector<2x8xf32>
    %205 = vector.shape_cast %204 : vector<2x8xf32> to vector<1x2x8xf32>
    %cst_96 = arith.constant dense<0.000000e+00> : vector<1xf32>
    %206 = vector.multi_reduction <add>, %205, %cst_96 [1, 2] : vector<1x2x8xf32> to vector<1xf32>
    %207 = vector.shape_cast %206 : vector<1xf32> to vector<1x1x1xf32>
    %208 = vector.extract %207[0, 0, 0] : f32 from vector<1x1x1xf32>
    %c1_i32_97 = arith.constant 1 : i32
    %209 = tpu.dynamic_rotate %126 by %c1_i32_97 dim 1 : vector<2x8xf32>, i32 -> vector<2x8xf32>
    %c7_i32_98 = arith.constant 7 : i32
    %210 = tpu.dynamic_rotate %126 by %c7_i32_98 dim 1 : vector<2x8xf32>, i32 -> vector<2x8xf32>
    %211 = arith.mulf %41, %209 : vector<2x8xf32>
    %212 = arith.mulf %47, %126 : vector<2x8xf32>
    %213 = arith.addf %211, %212 : vector<2x8xf32>
    %214 = arith.mulf %44, %210 : vector<2x8xf32>
    %215 = arith.addf %213, %214 : vector<2x8xf32>
    %c1_i32_99 = arith.constant 1 : i32
    %216 = tpu.dynamic_rotate %128 by %c1_i32_99 dim 1 : vector<2x8xf32>, i32 -> vector<2x8xf32>
    %c7_i32_100 = arith.constant 7 : i32
    %217 = tpu.dynamic_rotate %128 by %c7_i32_100 dim 1 : vector<2x8xf32>, i32 -> vector<2x8xf32>
    %218 = arith.mulf %68, %216 : vector<2x8xf32>
    %219 = arith.mulf %74, %128 : vector<2x8xf32>
    %220 = arith.addf %218, %219 : vector<2x8xf32>
    %221 = arith.mulf %71, %217 : vector<2x8xf32>
    %222 = arith.addf %220, %221 : vector<2x8xf32>
    %223 = arith.addf %215, %222 : vector<2x8xf32>
    %c1_i32_101 = arith.constant 1 : i32
    %224 = tpu.dynamic_rotate %130 by %c1_i32_101 dim 1 : vector<2x8xf32>, i32 -> vector<2x8xf32>
    %c7_i32_102 = arith.constant 7 : i32
    %225 = tpu.dynamic_rotate %130 by %c7_i32_102 dim 1 : vector<2x8xf32>, i32 -> vector<2x8xf32>
    %226 = arith.mulf %95, %224 : vector<2x8xf32>
    %227 = arith.mulf %101, %130 : vector<2x8xf32>
    %228 = arith.addf %226, %227 : vector<2x8xf32>
    %229 = arith.mulf %98, %225 : vector<2x8xf32>
    %230 = arith.addf %228, %229 : vector<2x8xf32>
    %231 = arith.addf %223, %230 : vector<2x8xf32>
    %cst_103 = arith.constant 1.12940909E+11 : f32
    %232 = vector.broadcast %cst_103 : f32 to vector<2x8xf32>
    %233 = arith.mulf %151, %232 : vector<2x8xf32>
    %234 = arith.subf %231, %233 : vector<2x8xf32>
    %235 = vector.shape_cast %234 : vector<2x8xf32> to vector<1x2x8xf32>
    %cst_104 = arith.constant dense<0.000000e+00> : vector<1xf32>
    %236 = vector.multi_reduction <add>, %235, %cst_104 [1, 2] : vector<1x2x8xf32> to vector<1xf32>
    %237 = vector.shape_cast %236 : vector<1xf32> to vector<1x1x1xf32>
    %238 = vector.extract %237[0, 0, 0] : f32 from vector<1x1x1xf32>
    %239 = arith.mulf %128, %124 : vector<2x8xf32>
    %240 = arith.mulf %130, %122 : vector<2x8xf32>
    %241 = arith.subf %239, %240 : vector<2x8xf32>
    %242 = arith.mulf %130, %120 : vector<2x8xf32>
    %243 = arith.mulf %126, %124 : vector<2x8xf32>
    %244 = arith.subf %242, %243 : vector<2x8xf32>
    %245 = arith.mulf %126, %122 : vector<2x8xf32>
    %246 = arith.mulf %128, %120 : vector<2x8xf32>
    %247 = arith.subf %245, %246 : vector<2x8xf32>
    %248 = arith.addf %120, %122 : vector<2x8xf32>
    %249 = arith.addf %248, %124 : vector<2x8xf32>
    %cst_105 = arith.constant 1.000000e+00 : f32
    %250 = vector.broadcast %cst_105 : f32 to vector<2x8xf32>
    %251 = arith.divf %250, %249 : vector<2x8xf32>
    %252 = arith.addf %241, %244 : vector<2x8xf32>
    %253 = arith.addf %252, %247 : vector<2x8xf32>
    %254 = arith.mulf %253, %251 : vector<2x8xf32>
    %255 = arith.addf %138, %140 : vector<2x8xf32>
    %256 = arith.addf %255, %142 : vector<2x8xf32>
    %257 = arith.subf %254, %256 : vector<2x8xf32>
    %258 = vector.shape_cast %257 : vector<2x8xf32> to vector<1x2x8xf32>
    %cst_106 = arith.constant dense<0.000000e+00> : vector<1xf32>
    %259 = vector.multi_reduction <add>, %258, %cst_106 [1, 2] : vector<1x2x8xf32> to vector<1xf32>
    %260 = vector.shape_cast %259 : vector<1xf32> to vector<1x1x1xf32>
    %261 = vector.extract %260[0, 0, 0] : f32 from vector<1x1x1xf32>
    %262 = arith.mulf %149, %132 : vector<2x8xf32>
    %263 = arith.mulf %149, %134 : vector<2x8xf32>
    %264 = arith.mulf %149, %136 : vector<2x8xf32>
    %c1_i32_107 = arith.constant 1 : i32
    %265 = tpu.dynamic_rotate %149 by %c1_i32_107 dim 1 : vector<2x8xf32>, i32 -> vector<2x8xf32>
    %c7_i32_108 = arith.constant 7 : i32
    %266 = tpu.dynamic_rotate %149 by %c7_i32_108 dim 1 : vector<2x8xf32>, i32 -> vector<2x8xf32>
    %267 = arith.mulf %109, %265 : vector<2x8xf32>
    %268 = arith.mulf %118, %149 : vector<2x8xf32>
    %269 = arith.addf %267, %268 : vector<2x8xf32>
    %270 = arith.mulf %115, %266 : vector<2x8xf32>
    %271 = arith.addf %269, %270 : vector<2x8xf32>
    %c1_i32_109 = arith.constant 1 : i32
    %272 = tpu.dynamic_rotate %262 by %c1_i32_109 dim 1 : vector<2x8xf32>, i32 -> vector<2x8xf32>
    %c7_i32_110 = arith.constant 7 : i32
    %273 = tpu.dynamic_rotate %262 by %c7_i32_110 dim 1 : vector<2x8xf32>, i32 -> vector<2x8xf32>
    %274 = arith.mulf %41, %272 : vector<2x8xf32>
    %275 = arith.mulf %47, %262 : vector<2x8xf32>
    %276 = arith.addf %274, %275 : vector<2x8xf32>
    %277 = arith.mulf %44, %273 : vector<2x8xf32>
    %278 = arith.addf %276, %277 : vector<2x8xf32>
    %279 = arith.addf %271, %278 : vector<2x8xf32>
    %c1_i32_111 = arith.constant 1 : i32
    %280 = tpu.dynamic_rotate %263 by %c1_i32_111 dim 1 : vector<2x8xf32>, i32 -> vector<2x8xf32>
    %c7_i32_112 = arith.constant 7 : i32
    %281 = tpu.dynamic_rotate %263 by %c7_i32_112 dim 1 : vector<2x8xf32>, i32 -> vector<2x8xf32>
    %282 = arith.mulf %68, %280 : vector<2x8xf32>
    %283 = arith.mulf %74, %263 : vector<2x8xf32>
    %284 = arith.addf %282, %283 : vector<2x8xf32>
    %285 = arith.mulf %71, %281 : vector<2x8xf32>
    %286 = arith.addf %284, %285 : vector<2x8xf32>
    %287 = arith.addf %279, %286 : vector<2x8xf32>
    %c1_i32_113 = arith.constant 1 : i32
    %288 = tpu.dynamic_rotate %264 by %c1_i32_113 dim 1 : vector<2x8xf32>, i32 -> vector<2x8xf32>
    %c7_i32_114 = arith.constant 7 : i32
    %289 = tpu.dynamic_rotate %264 by %c7_i32_114 dim 1 : vector<2x8xf32>, i32 -> vector<2x8xf32>
    %290 = arith.mulf %95, %288 : vector<2x8xf32>
    %291 = arith.mulf %101, %264 : vector<2x8xf32>
    %292 = arith.addf %290, %291 : vector<2x8xf32>
    %293 = arith.mulf %98, %289 : vector<2x8xf32>
    %294 = arith.addf %292, %293 : vector<2x8xf32>
    %295 = arith.addf %287, %294 : vector<2x8xf32>
    %296 = arith.mulf %295, %295 : vector<2x8xf32>
    %297 = vector.shape_cast %296 : vector<2x8xf32> to vector<1x2x8xf32>
    %cst_115 = arith.constant dense<0.000000e+00> : vector<1xf32>
    %298 = vector.multi_reduction <add>, %297, %cst_115 [1, 2] : vector<1x2x8xf32> to vector<1xf32>
    %299 = vector.shape_cast %298 : vector<1xf32> to vector<1x1x1xf32>
    %300 = vector.extract %299[0, 0, 0] : f32 from vector<1x1x1xf32>
    %301 = arith.mulf %149, %149 : vector<2x8xf32>
    %302 = math.sqrt %149 : vector<2x8xf32>
    %303 = arith.mulf %301, %302 : vector<2x8xf32>
    %304 = arith.divf %150, %303 : vector<2x8xf32>
    %c1_i32_116 = arith.constant 1 : i32
    %305 = tpu.dynamic_rotate %304 by %c1_i32_116 dim 1 : vector<2x8xf32>, i32 -> vector<2x8xf32>
    %c7_i32_117 = arith.constant 7 : i32
    %306 = tpu.dynamic_rotate %304 by %c7_i32_117 dim 1 : vector<2x8xf32>, i32 -> vector<2x8xf32>
    %307 = arith.mulf %109, %305 : vector<2x8xf32>
    %308 = arith.mulf %118, %304 : vector<2x8xf32>
    %309 = arith.addf %307, %308 : vector<2x8xf32>
    %310 = arith.mulf %115, %306 : vector<2x8xf32>
    %311 = arith.addf %309, %310 : vector<2x8xf32>
    %312 = arith.mulf %311, %311 : vector<2x8xf32>
    %313 = vector.shape_cast %312 : vector<2x8xf32> to vector<1x2x8xf32>
    %cst_118 = arith.constant dense<0.000000e+00> : vector<1xf32>
    %314 = vector.multi_reduction <add>, %313, %cst_118 [1, 2] : vector<1x2x8xf32> to vector<1xf32>
    %315 = vector.shape_cast %314 : vector<1xf32> to vector<1x1x1xf32>
    %316 = vector.extract %315[0, 0, 0] : f32 from vector<1x1x1xf32>
    %317 = arith.mulf %134, %124 : vector<2x8xf32>
    %318 = arith.mulf %136, %122 : vector<2x8xf32>
    %319 = arith.subf %317, %318 : vector<2x8xf32>
    %320 = arith.mulf %136, %120 : vector<2x8xf32>
    %321 = arith.mulf %132, %124 : vector<2x8xf32>
    %322 = arith.subf %320, %321 : vector<2x8xf32>
    %323 = arith.mulf %132, %122 : vector<2x8xf32>
    %324 = arith.mulf %134, %120 : vector<2x8xf32>
    %325 = arith.subf %323, %324 : vector<2x8xf32>
    %326 = arith.addf %126, %319 : vector<2x8xf32>
    %327 = arith.addf %128, %322 : vector<2x8xf32>
    %328 = arith.addf %130, %325 : vector<2x8xf32>
    %329 = arith.mulf %326, %326 : vector<2x8xf32>
    %330 = arith.mulf %327, %327 : vector<2x8xf32>
    %331 = arith.addf %329, %330 : vector<2x8xf32>
    %332 = arith.mulf %328, %328 : vector<2x8xf32>
    %333 = arith.addf %331, %332 : vector<2x8xf32>
    %334 = vector.shape_cast %333 : vector<2x8xf32> to vector<1x2x8xf32>
    %cst_119 = arith.constant dense<0.000000e+00> : vector<1xf32>
    %335 = vector.multi_reduction <add>, %334, %cst_119 [1, 2] : vector<1x2x8xf32> to vector<1xf32>
    %336 = vector.shape_cast %335 : vector<1xf32> to vector<1x1x1xf32>
    %337 = vector.extract %336[0, 0, 0] : f32 from vector<1x1x1xf32>
    %c1_i32_120 = arith.constant 1 : i32
    %338 = tpu.dynamic_rotate %319 by %c1_i32_120 dim 1 : vector<2x8xf32>, i32 -> vector<2x8xf32>
    %c7_i32_121 = arith.constant 7 : i32
    %339 = tpu.dynamic_rotate %319 by %c7_i32_121 dim 1 : vector<2x8xf32>, i32 -> vector<2x8xf32>
    %c1_i32_122 = arith.constant 1 : i32
    %340 = tpu.dynamic_rotate %322 by %c1_i32_122 dim 1 : vector<2x8xf32>, i32 -> vector<2x8xf32>
    %c7_i32_123 = arith.constant 7 : i32
    %341 = tpu.dynamic_rotate %322 by %c7_i32_123 dim 1 : vector<2x8xf32>, i32 -> vector<2x8xf32>
    %c1_i32_124 = arith.constant 1 : i32
    %342 = tpu.dynamic_rotate %325 by %c1_i32_124 dim 1 : vector<2x8xf32>, i32 -> vector<2x8xf32>
    %c7_i32_125 = arith.constant 7 : i32
    %343 = tpu.dynamic_rotate %325 by %c7_i32_125 dim 1 : vector<2x8xf32>, i32 -> vector<2x8xf32>
    %344 = arith.mulf %109, %152 : vector<2x8xf32>
    %345 = arith.mulf %118, %120 : vector<2x8xf32>
    %346 = arith.addf %344, %345 : vector<2x8xf32>
    %347 = arith.mulf %115, %153 : vector<2x8xf32>
    %348 = arith.addf %346, %347 : vector<2x8xf32>
    %349 = arith.mulf %68, %342 : vector<2x8xf32>
    %350 = arith.mulf %74, %325 : vector<2x8xf32>
    %351 = arith.addf %349, %350 : vector<2x8xf32>
    %352 = arith.mulf %71, %343 : vector<2x8xf32>
    %353 = arith.addf %351, %352 : vector<2x8xf32>
    %354 = arith.mulf %95, %340 : vector<2x8xf32>
    %355 = arith.mulf %101, %322 : vector<2x8xf32>
    %356 = arith.addf %354, %355 : vector<2x8xf32>
    %357 = arith.mulf %98, %341 : vector<2x8xf32>
    %358 = arith.addf %356, %357 : vector<2x8xf32>
    %359 = arith.subf %353, %358 : vector<2x8xf32>
    %360 = arith.subf %348, %359 : vector<2x8xf32>
    %361 = arith.mulf %109, %154 : vector<2x8xf32>
    %362 = arith.mulf %118, %122 : vector<2x8xf32>
    %363 = arith.addf %361, %362 : vector<2x8xf32>
    %364 = arith.mulf %115, %155 : vector<2x8xf32>
    %365 = arith.addf %363, %364 : vector<2x8xf32>
    %366 = arith.mulf %95, %338 : vector<2x8xf32>
    %367 = arith.mulf %101, %319 : vector<2x8xf32>
    %368 = arith.addf %366, %367 : vector<2x8xf32>
    %369 = arith.mulf %98, %339 : vector<2x8xf32>
    %370 = arith.addf %368, %369 : vector<2x8xf32>
    %371 = arith.mulf %41, %342 : vector<2x8xf32>
    %372 = arith.mulf %47, %325 : vector<2x8xf32>
    %373 = arith.addf %371, %372 : vector<2x8xf32>
    %374 = arith.mulf %44, %343 : vector<2x8xf32>
    %375 = arith.addf %373, %374 : vector<2x8xf32>
    %376 = arith.subf %370, %375 : vector<2x8xf32>
    %377 = arith.subf %365, %376 : vector<2x8xf32>
    %378 = arith.mulf %109, %156 : vector<2x8xf32>
    %379 = arith.mulf %118, %124 : vector<2x8xf32>
    %380 = arith.addf %378, %379 : vector<2x8xf32>
    %381 = arith.mulf %115, %157 : vector<2x8xf32>
    %382 = arith.addf %380, %381 : vector<2x8xf32>
    %383 = arith.mulf %41, %340 : vector<2x8xf32>
    %384 = arith.mulf %47, %322 : vector<2x8xf32>
    %385 = arith.addf %383, %384 : vector<2x8xf32>
    %386 = arith.mulf %44, %341 : vector<2x8xf32>
    %387 = arith.addf %385, %386 : vector<2x8xf32>
    %388 = arith.mulf %68, %338 : vector<2x8xf32>
    %389 = arith.mulf %74, %319 : vector<2x8xf32>
    %390 = arith.addf %388, %389 : vector<2x8xf32>
    %391 = arith.mulf %71, %339 : vector<2x8xf32>
    %392 = arith.addf %390, %391 : vector<2x8xf32>
    %393 = arith.subf %387, %392 : vector<2x8xf32>
    %394 = arith.subf %382, %393 : vector<2x8xf32>
    %395 = arith.mulf %360, %360 : vector<2x8xf32>
    %396 = arith.mulf %377, %377 : vector<2x8xf32>
    %397 = arith.addf %395, %396 : vector<2x8xf32>
    %398 = arith.mulf %394, %394 : vector<2x8xf32>
    %399 = arith.addf %397, %398 : vector<2x8xf32>
    %400 = vector.shape_cast %399 : vector<2x8xf32> to vector<1x2x8xf32>
    %cst_126 = arith.constant dense<0.000000e+00> : vector<1xf32>
    %401 = vector.multi_reduction <add>, %400, %cst_126 [1, 2] : vector<1x2x8xf32> to vector<1xf32>
    %402 = vector.shape_cast %401 : vector<1xf32> to vector<1x1x1xf32>
    %403 = vector.extract %402[0, 0, 0] : f32 from vector<1x1x1xf32>
    %404 = arith.mulf %146, %124 : vector<2x8xf32>
    %405 = arith.mulf %148, %122 : vector<2x8xf32>
    %406 = arith.subf %404, %405 : vector<2x8xf32>
    %407 = arith.mulf %148, %120 : vector<2x8xf32>
    %408 = arith.mulf %144, %124 : vector<2x8xf32>
    %409 = arith.subf %407, %408 : vector<2x8xf32>
    %410 = arith.mulf %144, %122 : vector<2x8xf32>
    %411 = arith.mulf %146, %120 : vector<2x8xf32>
    %412 = arith.subf %410, %411 : vector<2x8xf32>
    %413 = arith.mulf %120, %162 : vector<2x8xf32>
    %414 = arith.mulf %122, %167 : vector<2x8xf32>
    %415 = arith.addf %413, %414 : vector<2x8xf32>
    %416 = arith.mulf %124, %172 : vector<2x8xf32>
    %417 = arith.addf %415, %416 : vector<2x8xf32>
    %418 = arith.mulf %120, %177 : vector<2x8xf32>
    %419 = arith.mulf %122, %182 : vector<2x8xf32>
    %420 = arith.addf %418, %419 : vector<2x8xf32>
    %421 = arith.mulf %124, %187 : vector<2x8xf32>
    %422 = arith.addf %420, %421 : vector<2x8xf32>
    %423 = arith.mulf %120, %192 : vector<2x8xf32>
    %424 = arith.mulf %122, %197 : vector<2x8xf32>
    %425 = arith.addf %423, %424 : vector<2x8xf32>
    %426 = arith.mulf %124, %202 : vector<2x8xf32>
    %427 = arith.addf %425, %426 : vector<2x8xf32>
    %428 = arith.mulf %120, %120 : vector<2x8xf32>
    %429 = arith.mulf %122, %122 : vector<2x8xf32>
    %430 = arith.addf %428, %429 : vector<2x8xf32>
    %431 = arith.mulf %124, %124 : vector<2x8xf32>
    %432 = arith.addf %430, %431 : vector<2x8xf32>
    %cst_127 = arith.constant 397887.344 : f32
    %433 = vector.broadcast %cst_127 : f32 to vector<2x8xf32>
    %434 = arith.mulf %432, %433 : vector<2x8xf32>
    %c1_i32_128 = arith.constant 1 : i32
    %435 = tpu.dynamic_rotate %434 by %c1_i32_128 dim 1 : vector<2x8xf32>, i32 -> vector<2x8xf32>
    %c7_i32_129 = arith.constant 7 : i32
    %436 = tpu.dynamic_rotate %434 by %c7_i32_129 dim 1 : vector<2x8xf32>, i32 -> vector<2x8xf32>
    %cst_130 = arith.constant 795774.688 : f32
    %437 = vector.broadcast %cst_130 : f32 to vector<2x8xf32>
    %438 = arith.mulf %417, %437 : vector<2x8xf32>
    %439 = arith.subf %406, %438 : vector<2x8xf32>
    %440 = arith.mulf %41, %435 : vector<2x8xf32>
    %441 = arith.mulf %47, %434 : vector<2x8xf32>
    %442 = arith.addf %440, %441 : vector<2x8xf32>
    %443 = arith.mulf %44, %436 : vector<2x8xf32>
    %444 = arith.addf %442, %443 : vector<2x8xf32>
    %445 = arith.addf %439, %444 : vector<2x8xf32>
    %cst_131 = arith.constant 795774.688 : f32
    %446 = vector.broadcast %cst_131 : f32 to vector<2x8xf32>
    %447 = arith.mulf %422, %446 : vector<2x8xf32>
    %448 = arith.subf %409, %447 : vector<2x8xf32>
    %449 = arith.mulf %68, %435 : vector<2x8xf32>
    %450 = arith.mulf %74, %434 : vector<2x8xf32>
    %451 = arith.addf %449, %450 : vector<2x8xf32>
    %452 = arith.mulf %71, %436 : vector<2x8xf32>
    %453 = arith.addf %451, %452 : vector<2x8xf32>
    %454 = arith.addf %448, %453 : vector<2x8xf32>
    %cst_132 = arith.constant 795774.688 : f32
    %455 = vector.broadcast %cst_132 : f32 to vector<2x8xf32>
    %456 = arith.mulf %427, %455 : vector<2x8xf32>
    %457 = arith.subf %412, %456 : vector<2x8xf32>
    %458 = arith.mulf %95, %435 : vector<2x8xf32>
    %459 = arith.mulf %101, %434 : vector<2x8xf32>
    %460 = arith.addf %458, %459 : vector<2x8xf32>
    %461 = arith.mulf %98, %436 : vector<2x8xf32>
    %462 = arith.addf %460, %461 : vector<2x8xf32>
    %463 = arith.addf %457, %462 : vector<2x8xf32>
    %464 = arith.mulf %445, %445 : vector<2x8xf32>
    %465 = arith.mulf %454, %454 : vector<2x8xf32>
    %466 = arith.addf %464, %465 : vector<2x8xf32>
    %467 = arith.mulf %463, %463 : vector<2x8xf32>
    %468 = arith.addf %466, %467 : vector<2x8xf32>
    %469 = vector.shape_cast %468 : vector<2x8xf32> to vector<1x2x8xf32>
    %cst_133 = arith.constant dense<0.000000e+00> : vector<1xf32>
    %470 = vector.multi_reduction <add>, %469, %cst_133 [1, 2] : vector<1x2x8xf32> to vector<1xf32>
    %471 = vector.shape_cast %470 : vector<1xf32> to vector<1x1x1xf32>
    %472 = vector.extract %471[0, 0, 0] : f32 from vector<1x1x1xf32>
    %c0_134 = arith.constant 0 : index
    %473 = memref.load %arg10[%c0_134] : memref<8xf32, #tpu.memory_space<smem>>
    %cst_135 = arith.constant 6.250000e-02 : f32
    %474 = arith.mulf %208, %cst_135 : f32
    %475 = arith.addf %473, %474 : f32
    %c0_136 = arith.constant 0 : index
    %476 = memref.load %arg10[%c0_136] : memref<8xf32, #tpu.memory_space<smem>>
    memref.store %475, %arg10[%c0_136] : memref<8xf32, #tpu.memory_space<smem>>
    %c1_137 = arith.constant 1 : index
    %477 = memref.load %arg10[%c1_137] : memref<8xf32, #tpu.memory_space<smem>>
    %cst_138 = arith.constant 6.250000e-02 : f32
    %478 = arith.mulf %238, %cst_138 : f32
    %479 = arith.addf %477, %478 : f32
    %c1_139 = arith.constant 1 : index
    %480 = memref.load %arg10[%c1_139] : memref<8xf32, #tpu.memory_space<smem>>
    memref.store %479, %arg10[%c1_139] : memref<8xf32, #tpu.memory_space<smem>>
    %c2_140 = arith.constant 2 : index
    %481 = memref.load %arg10[%c2_140] : memref<8xf32, #tpu.memory_space<smem>>
    %cst_141 = arith.constant 0.020833334 : f32
    %482 = arith.mulf %261, %cst_141 : f32
    %483 = arith.addf %481, %482 : f32
    %c2_142 = arith.constant 2 : index
    %484 = memref.load %arg10[%c2_142] : memref<8xf32, #tpu.memory_space<smem>>
    memref.store %483, %arg10[%c2_142] : memref<8xf32, #tpu.memory_space<smem>>
    %c3 = arith.constant 3 : index
    %485 = memref.load %arg10[%c3] : memref<8xf32, #tpu.memory_space<smem>>
    %cst_143 = arith.constant 6.250000e-02 : f32
    %486 = arith.mulf %300, %cst_143 : f32
    %487 = arith.addf %485, %486 : f32
    %c3_144 = arith.constant 3 : index
    %488 = memref.load %arg10[%c3_144] : memref<8xf32, #tpu.memory_space<smem>>
    memref.store %487, %arg10[%c3_144] : memref<8xf32, #tpu.memory_space<smem>>
    %c4 = arith.constant 4 : index
    %489 = memref.load %arg10[%c4] : memref<8xf32, #tpu.memory_space<smem>>
    %cst_145 = arith.constant 6.250000e-02 : f32
    %490 = arith.mulf %316, %cst_145 : f32
    %491 = arith.addf %489, %490 : f32
    %c4_146 = arith.constant 4 : index
    %492 = memref.load %arg10[%c4_146] : memref<8xf32, #tpu.memory_space<smem>>
    memref.store %491, %arg10[%c4_146] : memref<8xf32, #tpu.memory_space<smem>>
    %c5 = arith.constant 5 : index
    %493 = memref.load %arg10[%c5] : memref<8xf32, #tpu.memory_space<smem>>
    %cst_147 = arith.constant 0.020833334 : f32
    %494 = arith.mulf %337, %cst_147 : f32
    %495 = arith.addf %493, %494 : f32
    %c5_148 = arith.constant 5 : index
    %496 = memref.load %arg10[%c5_148] : memref<8xf32, #tpu.memory_space<smem>>
    memref.store %495, %arg10[%c5_148] : memref<8xf32, #tpu.memory_space<smem>>
    %c6 = arith.constant 6 : index
    %497 = memref.load %arg10[%c6] : memref<8xf32, #tpu.memory_space<smem>>
    %cst_149 = arith.constant 0.020833334 : f32
    %498 = arith.mulf %403, %cst_149 : f32
    %499 = arith.addf %497, %498 : f32
    %c6_150 = arith.constant 6 : index
    %500 = memref.load %arg10[%c6_150] : memref<8xf32, #tpu.memory_space<smem>>
    memref.store %499, %arg10[%c6_150] : memref<8xf32, #tpu.memory_space<smem>>
    %c7 = arith.constant 7 : index
    %501 = memref.load %arg10[%c7] : memref<8xf32, #tpu.memory_space<smem>>
    %cst_151 = arith.constant 0.020833334 : f32
    %502 = arith.mulf %472, %cst_151 : f32
    %503 = arith.addf %501, %502 : f32
    %c7_152 = arith.constant 7 : index
    %504 = memref.load %arg10[%c7_152] : memref<8xf32, #tpu.memory_space<smem>>
    memref.store %503, %arg10[%c7_152] : memref<8xf32, #tpu.memory_space<smem>>
    return
  }
  func.func @transform_0(%arg0: i32) -> (i32, i32, i32) {
    %c0_i32 = arith.constant 0 : i32
    %c0_i32_0 = arith.constant 0 : i32
    %c0_i32_1 = arith.constant 0 : i32
    return %c0_i32, %arg0, %c0_i32_0 : i32, i32, i32
  }
  func.func @transform_1(%arg0: i32) -> (i32, i32, i32) {
    %c0_i32 = arith.constant 0 : i32
    %c0_i32_0 = arith.constant 0 : i32
    %c0_i32_1 = arith.constant 0 : i32
    return %c0_i32, %arg0, %c0_i32_0 : i32, i32, i32
  }
  func.func @transform_2(%arg0: i32) -> (i32, i32, i32) {
    %c0_i32 = arith.constant 0 : i32
    %c0_i32_0 = arith.constant 0 : i32
    %c0_i32_1 = arith.constant 0 : i32
    return %c0_i32, %arg0, %c0_i32_0 : i32, i32, i32
  }
  func.func @transform_3(%arg0: i32) -> (i32, i32, i32) {
    %c0_i32 = arith.constant 0 : i32
    %c0_i32_0 = arith.constant 0 : i32
    %c0_i32_1 = arith.constant 0 : i32
    return %c0_i32, %arg0, %c0_i32_0 : i32, i32, i32
  }
  func.func @transform_4(%arg0: i32) -> (i32, i32, i32) {
    %c0_i32 = arith.constant 0 : i32
    %c0_i32_0 = arith.constant 0 : i32
    %c0_i32_1 = arith.constant 0 : i32
    return %c0_i32, %arg0, %c0_i32_0 : i32, i32, i32
  }
  func.func @transform_5(%arg0: i32) -> (i32, i32, i32) {
    %c0_i32 = arith.constant 0 : i32
    %c0_i32_0 = arith.constant 0 : i32
    %c0_i32_1 = arith.constant 0 : i32
    return %c0_i32, %arg0, %c0_i32_0 : i32, i32, i32
  }
  func.func @transform_6(%arg0: i32) -> (i32, i32) {
    %c0_i32 = arith.constant 0 : i32
    %c0_i32_0 = arith.constant 0 : i32
    return %arg0, %c0_i32 : i32, i32
  }
  func.func @transform_7(%arg0: i32) -> (i32, i32) {
    %c0_i32 = arith.constant 0 : i32
    %c0_i32_0 = arith.constant 0 : i32
    return %arg0, %c0_i32 : i32, i32
  }
  func.func @transform_8(%arg0: i32) -> (i32, i32) {
    %c0_i32 = arith.constant 0 : i32
    %c0_i32_0 = arith.constant 0 : i32
    return %arg0, %c0_i32 : i32, i32
  }
  func.func @transform_9(%arg0: i32) -> i32 {
    %c0_i32 = arith.constant 0 : i32
    %c0_i32_0 = arith.constant 0 : i32
    return %c0_i32 : i32
  }
}

</mosaic_0001>

<llo_original>
// kernel: tpu_custom_call.1
$region0: #{tpu_custom_call.1}
  #allocation0 [shape = 'u32[]', space=smem, size = 0x4, offset = 0x4, fixed_abs, tag = 'smem constant byte address 0x4 - core index']
  #allocation1 [shape = 'u32[72,128]{1,0:T(1,128)}', space=vmem, size = 0x9000, scoped, tag = 'internal scratch']
  %s0 = inlined_call_operand.hbm [shape: f32[3,2,8], index: 0, kind: input, shape index: {}]
  %s1 = inlined_call_operand.hbm [shape: f32[3,2,8], index: 1, kind: input, shape index: {}]
  %s2 = inlined_call_operand.hbm [shape: f32[3,2,8], index: 2, kind: input, shape index: {}]
  %s3 = inlined_call_operand.hbm [shape: f32[3,2,8], index: 3, kind: input, shape index: {}]
  %s4 = inlined_call_operand.hbm [shape: f32[3,2,8], index: 4, kind: input, shape index: {}]
  %s5 = inlined_call_operand.hbm [shape: f32[3,2,8], index: 5, kind: input, shape index: {}]
  %s6 = inlined_call_operand.vmem [shape: f32[2,8], index: 6, kind: input, shape index: {}]
  %s7 = inlined_call_operand.vmem [shape: f32[2,8], index: 7, kind: input, shape index: {}]
  %s8 = inlined_call_operand.vmem [shape: f32[2,8], index: 8, kind: input, shape index: {}]
  %s9 = inlined_call_operand.hbm [shape: f32[8], index: 9, kind: output, shape index: {}]
  %s10 = sld [smem:[#allocation0]]
  $region74: #{tpu_custom_call.1} parent=0
    _
  %s12 = ssub.s32 1, %s10
  %s13 = scalar_select 0, %s12, %s10
  $region1: #{tpu_custom_call.1} parent=0
    #allocation2 [shape = 'u8[3072]{0}', space=vmem, size = 0xc00, scoped, tag = 'input window, operand 0, single buffered']
    #allocation3 [shape = 's32[1]{0}', space=sflag, size = 0x4, scoped, tag = 'scoped memory for tpu_custom_call.1']
    #allocation4 [shape = 's32[1]{0}', space=sflag, size = 0x4, scoped, tag = 'scoped memory for tpu_custom_call.1']
    #allocation5 [shape = 'u8[3072]{0}', space=vmem, size = 0xc00, scoped, tag = 'input window, operand 1, single buffered']
    #allocation6 [shape = 's32[1]{0}', space=sflag, size = 0x4, scoped, tag = 'scoped memory for tpu_custom_call.1']
    #allocation7 [shape = 'u8[3072]{0}', space=vmem, size = 0xc00, scoped, tag = 'input window, operand 2, single buffered']
    #allocation8 [shape = 'u8[3072]{0}', space=vmem, size = 0xc00, scoped, tag = 'input window, operand 3, single buffered']
    #allocation9 [shape = 's32[1]{0}', space=sflag, size = 0x4, scoped, tag = 'scoped memory for tpu_custom_call.1']
    #allocation10 [shape = 'u8[3072]{0}', space=vmem, size = 0xc00, scoped, tag = 'input window, operand 4, single buffered']
    #allocation11 [shape = 'u8[3072]{0}', space=vmem, size = 0xc00, scoped, tag = 'input window, operand 5, single buffered']
    #allocation12 [shape = 's32[1]{0}', space=sflag, size = 0x4, scoped, tag = 'scoped memory for tpu_custom_call.1']
    #allocation13 [shape = 'u8[512]{0}', space=smem, size = 0x200, scoped, tag = 'output window, operand 0, single buffered']
    %14 = vsyncpa [#allocation3], 0
    %15 = vsyncpa [#allocation6], 0
    %16 = vsyncpa [#allocation9], 0
    %17 = vsyncpa [#allocation12], 0
    %18 = vsyncpa [#allocation4], 0
    // Predicated region
    $region2: #{tpu_custom_call.1} parent=1 // pred_check
      _
    $region3: #{tpu_custom_call.1} parent=1 // pred_check_branch
      %20 = sbr.rel (0) target = $region5
    $region4: #{tpu_custom_call.1} parent=1 // pred_region
      %22 = vsyncadd [#allocation3], 0
      %s23 = sshll.u32 %s0, 4
      %s24 = int_to_ptr.hbm [resolvable:$true] %s23
      %s25 = sshll.u32 [#allocation2], 4
      %s26 = int_to_ptr.vmem [resolvable:$true] %s25
      %31 = dma.hbm_to_vmem [thread:$0]  %s24, 96, %s26, [#allocation3], 32, 32, 2
    $region5: #{tpu_custom_call.1} parent=1 // pred_fallthru
      _
    // Predicated region
    $region6: #{tpu_custom_call.1} parent=1 // pred_check
      _
    $region7: #{tpu_custom_call.1} parent=1 // pred_check_branch
      %33 = sbr.rel (0) target = $region9
    $region8: #{tpu_custom_call.1} parent=1 // pred_region
      %35 = vsyncadd [#allocation6], 0
      %s36 = sshll.u32 %s1, 4
      %s37 = int_to_ptr.hbm [resolvable:$true] %s36
      %s38 = sshll.u32 [#allocation5], 4
      %s39 = int_to_ptr.vmem [resolvable:$true] %s38
      %44 = dma.hbm_to_vmem [thread:$0]  %s37, 96, %s39, [#allocation6], 32, 32, 2
    $region9: #{tpu_custom_call.1} parent=1 // pred_fallthru
      _
    // Predicated region
    $region10: #{tpu_custom_call.1} parent=1 // pred_check
      _
    $region11: #{tpu_custom_call.1} parent=1 // pred_check_branch
      %46 = sbr.rel (0) target = $region13
    $region12: #{tpu_custom_call.1} parent=1 // pred_region
      %48 = vsyncadd [#allocation6], 0
      %s49 = sshll.u32 %s2, 4
      %s50 = int_to_ptr.hbm [resolvable:$true] %s49
      %s51 = sshll.u32 [#allocation7], 4
      %s52 = int_to_ptr.vmem [resolvable:$true] %s51
      %57 = dma.hbm_to_vmem [thread:$0]  %s50, 96, %s52, [#allocation6], 32, 32, 2
    $region13: #{tpu_custom_call.1} parent=1 // pred_fallthru
      _
    // Predicated region
    $region14: #{tpu_custom_call.1} parent=1 // pred_check
      _
    $region15: #{tpu_custom_call.1} parent=1 // pred_check_branch
      %59 = sbr.rel (0) target = $region17
    $region16: #{tpu_custom_call.1} parent=1 // pred_region
      %61 = vsyncadd [#allocation9], 0
      %s62 = sshll.u32 %s3, 4
      %s63 = int_to_ptr.hbm [resolvable:$true] %s62
      %s64 = sshll.u32 [#allocation8], 4
      %s65 = int_to_ptr.vmem [resolvable:$true] %s64
      %70 = dma.hbm_to_vmem [thread:$0]  %s63, 96, %s65, [#allocation9], 32, 32, 2
    $region17: #{tpu_custom_call.1} parent=1 // pred_fallthru
      _
    // Predicated region
    $region18: #{tpu_custom_call.1} parent=1 // pred_check
      _
    $region19: #{tpu_custom_call.1} parent=1 // pred_check_branch
      %72 = sbr.rel (0) target = $region21
    $region20: #{tpu_custom_call.1} parent=1 // pred_region
      %74 = vsyncadd [#allocation9], 0
      %s75 = sshll.u32 %s4, 4
      %s76 = int_to_ptr.hbm [resolvable:$true] %s75
      %s77 = sshll.u32 [#allocation10], 4
      %s78 = int_to_ptr.vmem [resolvable:$true] %s77
      %83 = dma.hbm_to_vmem [thread:$0]  %s76, 96, %s78, [#allocation9], 32, 32, 2
    $region21: #{tpu_custom_call.1} parent=1 // pred_fallthru
      _
    // Predicated region
    $region22: #{tpu_custom_call.1} parent=1 // pred_check
      _
    $region23: #{tpu_custom_call.1} parent=1 // pred_check_branch
      %85 = sbr.rel (0) target = $region25
    $region24: #{tpu_custom_call.1} parent=1 // pred_region
      %87 = vsyncadd [#allocation12], 0
      %s88 = sshll.u32 %s5, 4
      %s89 = int_to_ptr.hbm [resolvable:$true] %s88
      %s90 = sshll.u32 [#allocation11], 4
      %s91 = int_to_ptr.vmem [resolvable:$true] %s90
      %96 = dma.hbm_to_vmem [thread:$0]  %s89, 96, %s91, [#allocation12], 32, 32, 2
    $region25: #{tpu_custom_call.1} parent=1 // pred_fallthru
      _
    // Predicated region
    $region26: #{tpu_custom_call.1} parent=1 // pred_check
      _
    $region27: #{tpu_custom_call.1} parent=1 // pred_check_branch
      %98 = sbr.rel (0) target = $region29
    $region28: #{tpu_custom_call.1} parent=1 // pred_region
      _
    $region29: #{tpu_custom_call.1} parent=1 // pred_fallthru
      _
    // Predicated region
    $region30: #{tpu_custom_call.1} parent=1 // pred_check
      _
    $region31: #{tpu_custom_call.1} parent=1 // pred_check_branch
      %100 = sbr.rel (0) target = $region33
    $region32: #{tpu_custom_call.1} parent=1 // pred_region
      _
    $region33: #{tpu_custom_call.1} parent=1 // pred_fallthru
      _
    // Predicated region
    $region34: #{tpu_custom_call.1} parent=1 // pred_check
      _
    $region35: #{tpu_custom_call.1} parent=1 // pred_check_branch
      %102 = sbr.rel (0) target = $region37
    $region36: #{tpu_custom_call.1} parent=1 // pred_region
      _
    $region37: #{tpu_custom_call.1} parent=1 // pred_fallthru
      _
    // Predicated region
    $region38: #{tpu_custom_call.1} parent=1 // pred_check
      _
    $region39: #{tpu_custom_call.1} parent=1 // pred_check_branch
      %104 = sbr.rel (0) target = $region41
    $region40: #{tpu_custom_call.1} parent=1 // pred_region
      %106 = dma.done [#allocation3], 96
    $region41: #{tpu_custom_call.1} parent=1 // pred_fallthru
      _
    // Predicated region
    $region42: #{tpu_custom_call.1} parent=1 // pred_check
      _
    $region43: #{tpu_custom_call.1} parent=1 // pred_check_branch
      %108 = sbr.rel (0) target = $region45
    $region44: #{tpu_custom_call.1} parent=1 // pred_region
      %110 = dma.done [#allocation6], 96
    $region45: #{tpu_custom_call.1} parent=1 // pred_fallthru
      _
    // Predicated region
    $region46: #{tpu_custom_call.1} parent=1 // pred_check
      _
    $region47: #{tpu_custom_call.1} parent=1 // pred_check_branch
      %112 = sbr.rel (0) target = $region49
    $region48: #{tpu_custom_call.1} parent=1 // pred_region
      %114 = dma.done [#allocation6], 96
    $region49: #{tpu_custom_call.1} parent=1 // pred_fallthru
      _
    // Predicated region
    $region50: #{tpu_custom_call.1} parent=1 // pred_check
      _
    $region51: #{tpu_custom_call.1} parent=1 // pred_check_branch
      %116 = sbr.rel (0) target = $region53
    $region52: #{tpu_custom_call.1} parent=1 // pred_region
      %118 = dma.done [#allocation9], 96
    $region53: #{tpu_custom_call.1} parent=1 // pred_fallthru
      _
    // Predicated region
    $region54: #{tpu_custom_call.1} parent=1 // pred_check
      _
    $region55: #{tpu_custom_call.1} parent=1 // pred_check_branch
      %120 = sbr.rel (0) target = $region57
    $region56: #{tpu_custom_call.1} parent=1 // pred_region
      %122 = dma.done [#allocation9], 96
    $region57: #{tpu_custom_call.1} parent=1 // pred_fallthru
      _
    // Predicated region
    $region58: #{tpu_custom_call.1} parent=1 // pred_check
      _
    $region59: #{tpu_custom_call.1} parent=1 // pred_check_branch
      %124 = sbr.rel (0) target = $region61
    $region60: #{tpu_custom_call.1} parent=1 // pred_region
      %126 = dma.done [#allocation12], 96
    $region61: #{tpu_custom_call.1} parent=1 // pred_fallthru
      _
    %p127 = scmp.eq.s32.totalorder 0, 0
    // Predicated region
    $region62: #{tpu_custom_call.1} parent=1 // pred_check
      %p128 = pneg %p127
    $region63: #{tpu_custom_call.1} parent=1 // pred_check_branch
      %130 = sbr.rel (%p128) target = $region65
    $region64: #{tpu_custom_call.1} parent=1 // pred_region
      %s131 = scalar_lea.smem [#allocation13], 0
      %132 = sst [smem:[%s131]] 0.0
      %s133 = scalar_lea.smem [#allocation13], 1
      %134 = sst [smem:[%s133]] 0.0
      %s135 = scalar_lea.smem [#allocation13], 2
      %136 = sst [smem:[%s135]] 0.0
      %s137 = scalar_lea.smem [#allocation13], 3
      %138 = sst [smem:[%s137]] 0.0
      %s139 = scalar_lea.smem [#allocation13], 4
      %140 = sst [smem:[%s139]] 0.0
      %s141 = scalar_lea.smem [#allocation13], 5
      %142 = sst [smem:[%s141]] 0.0
      %s143 = scalar_lea.smem [#allocation13], 6
      %144 = sst [smem:[%s143]] 0.0
      %s145 = scalar_lea.smem [#allocation13], 7
      %146 = sst [smem:[%s145]] 0.0
    $region65: #{tpu_custom_call.1} parent=1 // pred_fallthru
      _
    %v147 = vlaneseq
    %v148 = vand.u32 %v147, 127
    %vm149 = vcmask 1047616
    %150 = vrot.lane.b32.xlu0 %v148, 8
    %v151 = vpop.permute.xlu0 %150
    %v152 = vsel %vm149, %v151, %v148
    %153 = vrot.lane.b32.xlu0 %v152, 8
    %v154 = vpop.permute.xlu0 %153
    %v155 = vsel %vm149, %v154, %v148
    %156 = vrot.lane.b32.xlu0 %v148, 7
    %v157 = vpop.permute.xlu0 %156
    %v158 = vsub.s32 %v155, %v157
    %159 = vrot.lane.b32.xlu0 %v148, 1
    %v160 = vpop.permute.xlu0 %159
    %v161 = vsub.s32 %v155, %v160
    %v162 = vmul.u32 %v158, %v158
    %vm163 = vcmp.eq.s32.totalorder %v162, 1
    %v164 = vmul.u32 %v161, %v161
    %vm165 = vcmp.eq.s32.totalorder %v164, 1
    %v166 = vsel %vm165, 1, 0
    %167 = vrot.lane.b32.xlu0 %v166, 6
    %v168 = vpop.permute.xlu0 %167
    %vm169 = vcmp.ne.s32.totalorder %v168, 0
    %vm170 = vmand %vm163, %vm169
    %v171 = vld [vmem:[#allocation11] sm:$0x3]
    %s172 = scalar_lea.vmem [#allocation11], 2
    %v173 = vld [vmem:[%s172] sm:$0x3]
    %s174 = scalar_lea.vmem [#allocation11], 4
    %v175 = vld [vmem:[%s174] sm:$0x3]
    %176 = vrot.lane.b32.xlu0 %v171, 8
    %v177 = vpop.permute.xlu0 %176
    %v178 = vsel %vm149, %v177, %v171
    %179 = vrot.lane.b32.xlu0 %v178, 8
    %v180 = vpop.permute.xlu0 %179
    %v181 = vsel %vm149, %v180, %v171
    %183 = vrot.lane.b32.xlu0 %v171, 7
    %v184 = vpop.permute.xlu0 %183
    %v186 = vsub.f32 %v181, %v184
    %187 = vrot.lane.b32.xlu0 %v171, 1
    %v188 = vpop.permute.xlu0 %187
    %v190 = vsub.f32 %v181, %v188
    %192 = vrot.lane.b32.xlu0 %v190, 6
    %v193 = vpop.permute.xlu0 %192
    %v195 = vmul.f32 %v186, %v193
    %197 = vrot.lane.b32.xlu0 %v186, 122
    %v198 = vpop.permute.xlu0 %197
    %v200 = vsub.f32 %v190, %v198
    %202 = vrot.lane.b32.xlu0 %v200, 6
    %v203 = vpop.permute.xlu0 %202
    %v205 = vmul.f32 %v195, %v203
    %v206 = vrcp.pop %v205
    %v207 = vmul.f32 %v205, %v206
    %v208 = vsub.f32 1.0, %v207
    %v209 = vmul.f32 %v206, %v208
    %v210 = vadd.f32 %v206, %v209
    %vm211 = vweird.f32 %v205
    %vm212 = vweird.f32 %v206
    %vm213 = vmor %vm211, %vm212
    %v214 = vsel %vm213, %v206, %v210
    %v215 = vand.u32 2147483647, %v205
    %vm216 = vcmp.eq.f32.partialorder %v215, 8.507059e+37
    %v217 = vand.u32 %v205, 2147483648
    %v218 = vor.u32 1.1754944e-38, %v217
    %v219 = vsel %vm216, %v218, %v214
    %v220 = vmul.f32 1.0, %v219
    %v221 = vmul.f32 %v190, %v190
    %223 = vrot.lane.b32.xlu0 %v220, 122
    %v224 = vpop.permute.xlu0 %223
    %v226 = vmul.f32 %v221, %v224
    %v227 = vmul.f32 %v186, %v186
    %v228 = vsub.f32 0.0, %v227
    %v229 = vmul.f32 %v228, %v220
    %v230 = vsel %vm163, %v186, %v193
    %v231 = vrcp.pop %v230
    %v232 = vmul.f32 %v230, %v231
    %v233 = vsub.f32 1.0, %v232
    %v234 = vmul.f32 %v231, %v233
    %v235 = vadd.f32 %v231, %v234
    %vm236 = vweird.f32 %v230
    %vm237 = vweird.f32 %v231
    %vm238 = vmor %vm236, %vm237
    %v239 = vsel %vm238, %v231, %v235
    %v240 = vand.u32 2147483647, %v230
    %vm241 = vcmp.eq.f32.partialorder %v240, 8.507059e+37
    %v242 = vand.u32 %v230, 2147483648
    %v243 = vor.u32 1.1754944e-38, %v242
    %v244 = vsel %vm241, %v243, %v239
    %v245 = vmul.f32 1.0, %v244
    %v246 = vsel %vm163, %v245, 0.0
    %248 = vrot.lane.b32.xlu0 %v226, 6
    %v249 = vpop.permute.xlu0 %248
    %v251 = vsel %vm170, %v249, %v246
    %253 = vrot.lane.b32.xlu0 %v245, 122
    %v254 = vpop.permute.xlu0 %253
    %v256 = vsel %vm165, %v254, 0.0
    %258 = vrot.lane.b32.xlu0 %v256, 6
    %v259 = vpop.permute.xlu0 %258
    %v261 = vsel %vm170, %v229, %v259
    %v262 = vadd.f32 %v251, %v261
    %v263 = vsub.f32 0.0, %v262
    %264 = vrot.lane.b32.xlu0 %v173, 8
    %v265 = vpop.permute.xlu0 %264
    %v266 = vsel %vm149, %v265, %v173
    %267 = vrot.lane.b32.xlu0 %v266, 8
    %v268 = vpop.permute.xlu0 %267
    %v269 = vsel %vm149, %v268, %v173
    %271 = vrot.lane.b32.xlu0 %v173, 7
    %v272 = vpop.permute.xlu0 %271
    %v274 = vsub.f32 %v269, %v272
    %275 = vrot.lane.b32.xlu0 %v173, 1
    %v276 = vpop.permute.xlu0 %275
    %v278 = vsub.f32 %v269, %v276
    %280 = vrot.lane.b32.xlu0 %v278, 6
    %v281 = vpop.permute.xlu0 %280
    %v283 = vmul.f32 %v274, %v281
    %285 = vrot.lane.b32.xlu0 %v274, 122
    %v286 = vpop.permute.xlu0 %285
    %v288 = vsub.f32 %v278, %v286
    %290 = vrot.lane.b32.xlu0 %v288, 6
    %v291 = vpop.permute.xlu0 %290
    %v293 = vmul.f32 %v283, %v291
    %v294 = vrcp.pop %v293
    %v295 = vmul.f32 %v293, %v294
    %v296 = vsub.f32 1.0, %v295
    %v297 = vmul.f32 %v294, %v296
    %v298 = vadd.f32 %v294, %v297
    %vm299 = vweird.f32 %v293
    %vm300 = vweird.f32 %v294
    %vm301 = vmor %vm299, %vm300
    %v302 = vsel %vm301, %v294, %v298
    %v303 = vand.u32 2147483647, %v293
    %vm304 = vcmp.eq.f32.partialorder %v303, 8.507059e+37
    %v305 = vand.u32 %v293, 2147483648
    %v306 = vor.u32 1.1754944e-38, %v305
    %v307 = vsel %vm304, %v306, %v302
    %v308 = vmul.f32 1.0, %v307
    %v309 = vmul.f32 %v278, %v278
    %311 = vrot.lane.b32.xlu0 %v308, 122
    %v312 = vpop.permute.xlu0 %311
    %v314 = vmul.f32 %v309, %v312
    %v315 = vmul.f32 %v274, %v274
    %v316 = vsub.f32 0.0, %v315
    %v317 = vmul.f32 %v316, %v308
    %v318 = vsel %vm163, %v274, %v281
    %v319 = vrcp.pop %v318
    %v320 = vmul.f32 %v318, %v319
    %v321 = vsub.f32 1.0, %v320
    %v322 = vmul.f32 %v319, %v321
    %v323 = vadd.f32 %v319, %v322
    %vm324 = vweird.f32 %v318
    %vm325 = vweird.f32 %v319
    %vm326 = vmor %vm324, %vm325
    %v327 = vsel %vm326, %v319, %v323
    %v328 = vand.u32 2147483647, %v318
    %vm329 = vcmp.eq.f32.partialorder %v328, 8.507059e+37
    %v330 = vand.u32 %v318, 2147483648
    %v331 = vor.u32 1.1754944e-38, %v330
    %v332 = vsel %vm329, %v331, %v327
    %v333 = vmul.f32 1.0, %v332
    %v334 = vsel %vm163, %v333, 0.0
    %336 = vrot.lane.b32.xlu0 %v314, 6
    %v337 = vpop.permute.xlu0 %336
    %v339 = vsel %vm170, %v337, %v334
    %341 = vrot.lane.b32.xlu0 %v333, 122
    %v342 = vpop.permute.xlu0 %341
    %v344 = vsel %vm165, %v342, 0.0
    %346 = vrot.lane.b32.xlu0 %v344, 6
    %v347 = vpop.permute.xlu0 %346
    %v349 = vsel %vm170, %v317, %v347
    %v350 = vadd.f32 %v339, %v349
    %v351 = vsub.f32 0.0, %v350
    %352 = vrot.lane.b32.xlu0 %v175, 8
    %v353 = vpop.permute.xlu0 %352
    %v354 = vsel %vm149, %v353, %v175
    %355 = vrot.lane.b32.xlu0 %v354, 8
    %v356 = vpop.permute.xlu0 %355
    %v357 = vsel %vm149, %v356, %v175
    %359 = vrot.lane.b32.xlu0 %v175, 7
    %v360 = vpop.permute.xlu0 %359
    %v362 = vsub.f32 %v357, %v360
    %363 = vrot.lane.b32.xlu0 %v175, 1
    %v364 = vpop.permute.xlu0 %363
    %v366 = vsub.f32 %v357, %v364
    %368 = vrot.lane.b32.xlu0 %v366, 6
    %v369 = vpop.permute.xlu0 %368
    %v371 = vmul.f32 %v362, %v369
    %373 = vrot.lane.b32.xlu0 %v362, 122
    %v374 = vpop.permute.xlu0 %373
    %v376 = vsub.f32 %v366, %v374
    %378 = vrot.lane.b32.xlu0 %v376, 6
    %v379 = vpop.permute.xlu0 %378
    %v381 = vmul.f32 %v371, %v379
    %v382 = vrcp.pop %v381
    %v383 = vmul.f32 %v381, %v382
    %v384 = vsub.f32 1.0, %v383
    %v385 = vmul.f32 %v382, %v384
    %v386 = vadd.f32 %v382, %v385
    %vm387 = vweird.f32 %v381
    %vm388 = vweird.f32 %v382
    %vm389 = vmor %vm387, %vm388
    %v390 = vsel %vm389, %v382, %v386
    %v391 = vand.u32 2147483647, %v381
    %vm392 = vcmp.eq.f32.partialorder %v391, 8.507059e+37
    %v393 = vand.u32 %v381, 2147483648
    %v394 = vor.u32 1.1754944e-38, %v393
    %v395 = vsel %vm392, %v394, %v390
    %v396 = vmul.f32 1.0, %v395
    %v397 = vmul.f32 %v366, %v366
    %399 = vrot.lane.b32.xlu0 %v396, 122
    %v400 = vpop.permute.xlu0 %399
    %v402 = vmul.f32 %v397, %v400
    %v403 = vmul.f32 %v362, %v362
    %v404 = vsub.f32 0.0, %v403
    %v405 = vmul.f32 %v404, %v396
    %v406 = vsel %vm163, %v362, %v369
    %v407 = vrcp.pop %v406
    %v408 = vmul.f32 %v406, %v407
    %v409 = vsub.f32 1.0, %v408
    %v410 = vmul.f32 %v407, %v409
    %v411 = vadd.f32 %v407, %v410
    %vm412 = vweird.f32 %v406
    %vm413 = vweird.f32 %v407
    %vm414 = vmor %vm412, %vm413
    %v415 = vsel %vm414, %v407, %v411
    %v416 = vand.u32 2147483647, %v406
    %vm417 = vcmp.eq.f32.partialorder %v416, 8.507059e+37
    %v418 = vand.u32 %v406, 2147483648
    %v419 = vor.u32 1.1754944e-38, %v418
    %v420 = vsel %vm417, %v419, %v415
    %v421 = vmul.f32 1.0, %v420
    %v422 = vsel %vm163, %v421, 0.0
    %424 = vrot.lane.b32.xlu0 %v402, 6
    %v425 = vpop.permute.xlu0 %424
    %v427 = vsel %vm170, %v425, %v422
    %429 = vrot.lane.b32.xlu0 %v421, 122
    %v430 = vpop.permute.xlu0 %429
    %v432 = vsel %vm165, %v430, 0.0
    %434 = vrot.lane.b32.xlu0 %v432, 6
    %v435 = vpop.permute.xlu0 %434
    %v437 = vsel %vm170, %v405, %v435
    %v438 = vadd.f32 %v427, %v437
    %v439 = vsub.f32 0.0, %v438
    %v440 = vcvt.s32.f32 %v158
    %v441 = vcvt.s32.f32 %v161
    %v442 = vsel %vm163, 0.0033333334, 0.0
    %v443 = vsel %vm170, 0.0016666667, %v442
    %v444 = vmul.f32 %v440, %v443
    %v445 = vsel %vm165, 0.0033333334, 0.0
    %447 = vrot.lane.b32.xlu0 %v445, 6
    %v448 = vpop.permute.xlu0 %447
    %v450 = vsel %vm170, 0.0016666667, %v448
    %452 = vrot.lane.b32.xlu0 %v450, 122
    %v453 = vpop.permute.xlu0 %452
    %v455 = vmul.f32 %v441, %v453
    %457 = vrot.lane.b32.xlu0 %v455, 6
    %v458 = vpop.permute.xlu0 %457
    %v460 = vadd.f32 %v444, %v458
    %v461 = vsub.f32 0.0, %v460
    %v462 = vld [vmem:[#allocation2] sm:$0x3]
    %s463 = scalar_lea.vmem [#allocation2], 2
    %v464 = vld [vmem:[%s463] sm:$0x3]
    %s465 = scalar_lea.vmem [#allocation2], 4
    %v466 = vld [vmem:[%s465] sm:$0x3]
    %v467 = vld [vmem:[#allocation5] sm:$0x3]
    %s468 = scalar_lea.vmem [#allocation5], 2
    %v469 = vld [vmem:[%s468] sm:$0x3]
    %s470 = scalar_lea.vmem [#allocation5], 4
    %v471 = vld [vmem:[%s470] sm:$0x3]
    %v472 = vld [vmem:[#allocation7] sm:$0x3]
    %s473 = scalar_lea.vmem [#allocation7], 2
    %v474 = vld [vmem:[%s473] sm:$0x3]
    %s475 = scalar_lea.vmem [#allocation7], 4
    %v476 = vld [vmem:[%s475] sm:$0x3]
    %v477 = vld [vmem:[#allocation8] sm:$0x3]
    %s478 = scalar_lea.vmem [#allocation8], 2
    %v479 = vld [vmem:[%s478] sm:$0x3]
    %s480 = scalar_lea.vmem [#allocation8], 4
    %v481 = vld [vmem:[%s480] sm:$0x3]
    %v482 = vld [vmem:[#allocation10] sm:$0x3]
    %s483 = scalar_lea.vmem [#allocation10], 2
    %v484 = vld [vmem:[%s483] sm:$0x3]
    %s485 = scalar_lea.vmem [#allocation10], 4
    %v486 = vld [vmem:[%s485] sm:$0x3]
    %v487 = vld [vmem:[%s6] sm:$0x3]
    %v488 = vld [vmem:[%s7] sm:$0x3]
    %v489 = vld [vmem:[%s8] sm:$0x3]
    %490 = vrot.lane.b32.xlu0 %v462, 8
    %v491 = vpop.permute.xlu0 %490
    %v492 = vsel %vm149, %v491, %v462
    %493 = vrot.lane.b32.xlu0 %v492, 8
    %v494 = vpop.permute.xlu0 %493
    %v495 = vsel %vm149, %v494, %v462
    %496 = vrot.lane.b32.xlu0 %v464, 8
    %v497 = vpop.permute.xlu0 %496
    %v498 = vsel %vm149, %v497, %v464
    %499 = vrot.lane.b32.xlu0 %v498, 8
    %v500 = vpop.permute.xlu0 %499
    %v501 = vsel %vm149, %v500, %v464
    %502 = vrot.lane.b32.xlu0 %v466, 8
    %v503 = vpop.permute.xlu0 %502
    %v504 = vsel %vm149, %v503, %v466
    %505 = vrot.lane.b32.xlu0 %v504, 8
    %v506 = vpop.permute.xlu0 %505
    %v507 = vsel %vm149, %v506, %v466
    %v508 = vmul.f32 %v251, %v495
    %510 = vrot.lane.b32.xlu0 %v462, 7
    %v511 = vpop.permute.xlu0 %510
    %v513 = vmul.f32 %v263, %v511
    %v514 = vadd.f32 %v508, %v513
    %516 = vrot.lane.b32.xlu0 %v495, 6
    %v517 = vpop.permute.xlu0 %516
    %v519 = vmul.f32 %v261, %v517
    %v520 = vadd.f32 %v514, %v519
    %v521 = vmul.f32 %v339, %v495
    %v522 = vmul.f32 %v351, %v511
    %v523 = vadd.f32 %v521, %v522
    %v524 = vmul.f32 %v349, %v517
    %v525 = vadd.f32 %v523, %v524
    %v526 = vmul.f32 %v427, %v495
    %v527 = vmul.f32 %v439, %v511
    %v528 = vadd.f32 %v526, %v527
    %v529 = vmul.f32 %v437, %v517
    %v530 = vadd.f32 %v528, %v529
    %v531 = vmul.f32 %v251, %v501
    %533 = vrot.lane.b32.xlu0 %v464, 7
    %v534 = vpop.permute.xlu0 %533
    %v536 = vmul.f32 %v263, %v534
    %v537 = vadd.f32 %v531, %v536
    %539 = vrot.lane.b32.xlu0 %v501, 6
    %v540 = vpop.permute.xlu0 %539
    %v542 = vmul.f32 %v261, %v540
    %v543 = vadd.f32 %v537, %v542
    %v544 = vmul.f32 %v339, %v501
    %v545 = vmul.f32 %v351, %v534
    %v546 = vadd.f32 %v544, %v545
    %v547 = vmul.f32 %v349, %v540
    %v548 = vadd.f32 %v546, %v547
    %v549 = vmul.f32 %v427, %v501
    %v550 = vmul.f32 %v439, %v534
    %v551 = vadd.f32 %v549, %v550
    %v552 = vmul.f32 %v437, %v540
    %v553 = vadd.f32 %v551, %v552
    %v554 = vmul.f32 %v251, %v507
    %556 = vrot.lane.b32.xlu0 %v466, 7
    %v557 = vpop.permute.xlu0 %556
    %v559 = vmul.f32 %v263, %v557
    %v560 = vadd.f32 %v554, %v559
    %562 = vrot.lane.b32.xlu0 %v507, 6
    %v563 = vpop.permute.xlu0 %562
    %v565 = vmul.f32 %v261, %v563
    %v566 = vadd.f32 %v560, %v565
    %v567 = vmul.f32 %v339, %v507
    %v568 = vmul.f32 %v351, %v557
    %v569 = vadd.f32 %v567, %v568
    %v570 = vmul.f32 %v349, %v563
    %v571 = vadd.f32 %v569, %v570
    %v572 = vmul.f32 %v427, %v507
    %v573 = vmul.f32 %v439, %v557
    %v574 = vadd.f32 %v572, %v573
    %v575 = vmul.f32 %v437, %v563
    %v576 = vadd.f32 %v574, %v575
    %v577 = vadd.f32 %v520, %v548
    %v578 = vadd.f32 %v577, %v576
    %580 = vrot.lane.b32.xlu0 %v578, 121
    %v581 = vpop.permute.xlu0 %580
    %vm583 = vcmask 58368
    %v584 = vsel %vm583, %v581, 0.0
    %585 = vadd.xlane.f32.xlu0 %v584
    %v586 = vpop.xlane.xlu0 %585
    %v587 = vrot.slane %v586, 4
    %v588 = vadd.f32 %v586, %v587
    %v589 = vrot.slane %v588, 2
    %v590 = vadd.f32 %v588, %v589
    %v591 = vrot.slane %v590, 1
    %v592 = vadd.f32 %v590, %v591
    %s593 = vtos %v592
    %594 = vrot.lane.b32.xlu0 %v467, 8
    %v595 = vpop.permute.xlu0 %594
    %v596 = vsel %vm149, %v595, %v467
    %597 = vrot.lane.b32.xlu0 %v596, 8
    %v598 = vpop.permute.xlu0 %597
    %v599 = vsel %vm149, %v598, %v467
    %v600 = vmul.f32 %v251, %v599
    %602 = vrot.lane.b32.xlu0 %v467, 7
    %v603 = vpop.permute.xlu0 %602
    %v605 = vmul.f32 %v263, %v603
    %v606 = vadd.f32 %v600, %v605
    %608 = vrot.lane.b32.xlu0 %v599, 6
    %v609 = vpop.permute.xlu0 %608
    %v611 = vmul.f32 %v261, %v609
    %v612 = vadd.f32 %v606, %v611
    %613 = vrot.lane.b32.xlu0 %v469, 8
    %v614 = vpop.permute.xlu0 %613
    %v615 = vsel %vm149, %v614, %v469
    %616 = vrot.lane.b32.xlu0 %v615, 8
    %v617 = vpop.permute.xlu0 %616
    %v618 = vsel %vm149, %v617, %v469
    %v619 = vmul.f32 %v339, %v618
    %621 = vrot.lane.b32.xlu0 %v469, 7
    %v622 = vpop.permute.xlu0 %621
    %v624 = vmul.f32 %v351, %v622
    %v625 = vadd.f32 %v619, %v624
    %627 = vrot.lane.b32.xlu0 %v618, 6
    %v628 = vpop.permute.xlu0 %627
    %v630 = vmul.f32 %v349, %v628
    %v631 = vadd.f32 %v625, %v630
    %v632 = vadd.f32 %v612, %v631
    %633 = vrot.lane.b32.xlu0 %v471, 8
    %v634 = vpop.permute.xlu0 %633
    %v635 = vsel %vm149, %v634, %v471
    %636 = vrot.lane.b32.xlu0 %v635, 8
    %v637 = vpop.permute.xlu0 %636
    %v638 = vsel %vm149, %v637, %v471
    %v639 = vmul.f32 %v427, %v638
    %641 = vrot.lane.b32.xlu0 %v471, 7
    %v642 = vpop.permute.xlu0 %641
    %v644 = vmul.f32 %v439, %v642
    %v645 = vadd.f32 %v639, %v644
    %647 = vrot.lane.b32.xlu0 %v638, 6
    %v648 = vpop.permute.xlu0 %647
    %v650 = vmul.f32 %v437, %v648
    %v651 = vadd.f32 %v645, %v650
    %v652 = vadd.f32 %v632, %v651
    %v653 = vmul.f32 %v489, 1.1294091e+11
    %655 = vrot.lane.b32.xlu0 %v653, 7
    %v656 = vpop.permute.xlu0 %655
    %v658 = vsub.f32 %v652, %v656
    %660 = vrot.lane.b32.xlu0 %v658, 121
    %v661 = vpop.permute.xlu0 %660
    %v663 = vsel %vm583, %v661, 0.0
    %664 = vadd.xlane.f32.xlu0 %v663
    %v665 = vpop.xlane.xlu0 %664
    %v666 = vrot.slane %v665, 4
    %v667 = vadd.f32 %v665, %v666
    %v668 = vrot.slane %v667, 2
    %v669 = vadd.f32 %v667, %v668
    %v670 = vrot.slane %v669, 1
    %v671 = vadd.f32 %v669, %v670
    %s672 = vtos %v671
    %v673 = vmul.f32 %v469, %v466
    %v674 = vmul.f32 %v471, %v464
    %v675 = vsub.f32 %v673, %v674
    %v676 = vmul.f32 %v471, %v462
    %v677 = vmul.f32 %v467, %v466
    %v678 = vsub.f32 %v676, %v677
    %v679 = vmul.f32 %v467, %v464
    %v680 = vmul.f32 %v469, %v462
    %v681 = vsub.f32 %v679, %v680
    %v682 = vadd.f32 %v462, %v464
    %v683 = vadd.f32 %v682, %v466
    %v684 = vrcp.pop %v683
    %v685 = vmul.f32 %v683, %v684
    %v686 = vsub.f32 1.0, %v685
    %v687 = vmul.f32 %v684, %v686
    %v688 = vadd.f32 %v684, %v687
    %vm689 = vweird.f32 %v683
    %vm690 = vweird.f32 %v684
    %vm691 = vmor %vm689, %vm690
    %v692 = vsel %vm691, %v684, %v688
    %v693 = vand.u32 2147483647, %v683
    %vm694 = vcmp.eq.f32.partialorder %v693, 8.507059e+37
    %v695 = vand.u32 %v683, 2147483648
    %v696 = vor.u32 1.1754944e-38, %v695
    %v697 = vsel %vm694, %v696, %v692
    %v698 = vmul.f32 1.0, %v697
    %v699 = vadd.f32 %v675, %v678
    %v700 = vadd.f32 %v699, %v681
    %v701 = vmul.f32 %v700, %v698
    %v702 = vadd.f32 %v477, %v479
    %v703 = vadd.f32 %v702, %v481
    %v704 = vsub.f32 %v701, %v703
    %v705 = vsel %vm583, %v704, 0.0
    %706 = vadd.xlane.f32.xlu0 %v705
    %v707 = vpop.xlane.xlu0 %706
    %v708 = vrot.slane %v707, 4
    %v709 = vadd.f32 %v707, %v708
    %v710 = vrot.slane %v709, 2
    %v711 = vadd.f32 %v709, %v710
    %v712 = vrot.slane %v711, 1
    %v713 = vadd.f32 %v711, %v712
    %s714 = vtos %v713
    %v715 = vmul.f32 %v487, %v472
    %v716 = vmul.f32 %v487, %v474
    %v717 = vmul.f32 %v487, %v476
    %718 = vrot.lane.b32.xlu0 %v487, 8
    %v719 = vpop.permute.xlu0 %718
    %v720 = vsel %vm149, %v719, %v487
    %721 = vrot.lane.b32.xlu0 %v720, 8
    %v722 = vpop.permute.xlu0 %721
    %v723 = vsel %vm149, %v722, %v487
    %v724 = vmul.f32 %v444, %v723
    %726 = vrot.lane.b32.xlu0 %v487, 7
    %v727 = vpop.permute.xlu0 %726
    %v729 = vmul.f32 %v461, %v727
    %v730 = vadd.f32 %v724, %v729
    %v731 = vmul.f32 %v455, %v723
    %733 = vrot.lane.b32.xlu0 %v731, 6
    %v734 = vpop.permute.xlu0 %733
    %v736 = vadd.f32 %v730, %v734
    %737 = vrot.lane.b32.xlu0 %v715, 8
    %v738 = vpop.permute.xlu0 %737
    %v739 = vsel %vm149, %v738, %v715
    %740 = vrot.lane.b32.xlu0 %v739, 8
    %v741 = vpop.permute.xlu0 %740
    %v742 = vsel %vm149, %v741, %v715
    %v743 = vmul.f32 %v251, %v742
    %745 = vrot.lane.b32.xlu0 %v715, 7
    %v746 = vpop.permute.xlu0 %745
    %v748 = vmul.f32 %v263, %v746
    %v749 = vadd.f32 %v743, %v748
    %751 = vrot.lane.b32.xlu0 %v742, 6
    %v752 = vpop.permute.xlu0 %751
    %v754 = vmul.f32 %v261, %v752
    %v755 = vadd.f32 %v749, %v754
    %v756 = vadd.f32 %v736, %v755
    %757 = vrot.lane.b32.xlu0 %v716, 8
    %v758 = vpop.permute.xlu0 %757
    %v759 = vsel %vm149, %v758, %v716
    %760 = vrot.lane.b32.xlu0 %v759, 8
    %v761 = vpop.permute.xlu0 %760
    %v762 = vsel %vm149, %v761, %v716
    %v763 = vmul.f32 %v339, %v762
    %765 = vrot.lane.b32.xlu0 %v716, 7
    %v766 = vpop.permute.xlu0 %765
    %v768 = vmul.f32 %v351, %v766
    %v769 = vadd.f32 %v763, %v768
    %771 = vrot.lane.b32.xlu0 %v762, 6
    %v772 = vpop.permute.xlu0 %771
    %v774 = vmul.f32 %v349, %v772
    %v775 = vadd.f32 %v769, %v774
    %v776 = vadd.f32 %v756, %v775
    %777 = vrot.lane.b32.xlu0 %v717, 8
    %v778 = vpop.permute.xlu0 %777
    %v779 = vsel %vm149, %v778, %v717
    %780 = vrot.lane.b32.xlu0 %v779, 8
    %v781 = vpop.permute.xlu0 %780
    %v782 = vsel %vm149, %v781, %v717
    %v783 = vmul.f32 %v427, %v782
    %785 = vrot.lane.b32.xlu0 %v717, 7
    %v786 = vpop.permute.xlu0 %785
    %v788 = vmul.f32 %v439, %v786
    %v789 = vadd.f32 %v783, %v788
    %791 = vrot.lane.b32.xlu0 %v782, 6
    %v792 = vpop.permute.xlu0 %791
    %v794 = vmul.f32 %v437, %v792
    %v795 = vadd.f32 %v789, %v794
    %v796 = vadd.f32 %v776, %v795
    %v797 = vmul.f32 %v796, %v796
    %799 = vrot.lane.b32.xlu0 %v797, 121
    %v800 = vpop.permute.xlu0 %799
    %v802 = vsel %vm583, %v800, 0.0
    %803 = vadd.xlane.f32.xlu0 %v802
    %v804 = vpop.xlane.xlu0 %803
    %v805 = vrot.slane %v804, 4
    %v806 = vadd.f32 %v804, %v805
    %v807 = vrot.slane %v806, 2
    %v808 = vadd.f32 %v806, %v807
    %v809 = vrot.slane %v808, 1
    %v810 = vadd.f32 %v808, %v809
    %s811 = vtos %v810
    %v812 = vmul.f32 %v487, %v487
    %v813 = vrsqrt.pop %v487
    %v814 = vmul.f32 %v813, %v487
    %v815 = vmul.f32 %v814, %v813
    %v816 = vmul.f32 0.5, %v815
    %v817 = vsub.f32 1.5, %v816
    %v818 = vmul.f32 %v813, %v817
    %v819 = vmul.f32 %v487, %v818
    %vm820 = vcmp.eq.f32.partialorder %v487, inf
    %v821 = vsel %vm820, %v487, %v819
    %vm822 = vcmp.eq.f32.partialorder %v487, 0.0
    %v823 = vand.u32 %v487, 2147483648
    %v824 = vsel %vm822, %v823, %v821
    %v825 = vmul.f32 %v812, %v824
    %v826 = vrcp.pop %v825
    %v827 = vmul.f32 %v825, %v826
    %v828 = vsub.f32 1.0, %v827
    %v829 = vmul.f32 %v826, %v828
    %v830 = vadd.f32 %v826, %v829
    %vm831 = vweird.f32 %v825
    %vm832 = vweird.f32 %v826
    %vm833 = vmor %vm831, %vm832
    %v834 = vsel %vm833, %v826, %v830
    %v835 = vand.u32 2147483647, %v825
    %vm836 = vcmp.eq.f32.partialorder %v835, 8.507059e+37
    %v837 = vand.u32 %v825, 2147483648
    %v838 = vor.u32 1.1754944e-38, %v837
    %v839 = vsel %vm836, %v838, %v834
    %v840 = vmul.f32 %v488, %v839
    %841 = vrot.lane.b32.xlu0 %v840, 8
    %v842 = vpop.permute.xlu0 %841
    %v843 = vsel %vm149, %v842, %v840
    %844 = vrot.lane.b32.xlu0 %v843, 8
    %v845 = vpop.permute.xlu0 %844
    %v846 = vsel %vm149, %v845, %v840
    %v847 = vmul.f32 %v444, %v846
    %849 = vrot.lane.b32.xlu0 %v840, 7
    %v850 = vpop.permute.xlu0 %849
    %v852 = vmul.f32 %v461, %v850
    %v853 = vadd.f32 %v847, %v852
    %v854 = vmul.f32 %v455, %v846
    %856 = vrot.lane.b32.xlu0 %v854, 6
    %v857 = vpop.permute.xlu0 %856
    %v859 = vadd.f32 %v853, %v857
    %v860 = vmul.f32 %v859, %v859
    %862 = vrot.lane.b32.xlu0 %v860, 121
    %v863 = vpop.permute.xlu0 %862
    %v865 = vsel %vm583, %v863, 0.0
    %866 = vadd.xlane.f32.xlu0 %v865
    %v867 = vpop.xlane.xlu0 %866
    %v868 = vrot.slane %v867, 4
    %v869 = vadd.f32 %v867, %v868
    %v870 = vrot.slane %v869, 2
    %v871 = vadd.f32 %v869, %v870
    %v872 = vrot.slane %v871, 1
    %v873 = vadd.f32 %v871, %v872
    %s874 = vtos %v873
    %v875 = vmul.f32 %v474, %v466
    %v876 = vmul.f32 %v476, %v464
    %v877 = vsub.f32 %v875, %v876
    %v878 = vmul.f32 %v476, %v462
    %v879 = vmul.f32 %v472, %v466
    %v880 = vsub.f32 %v878, %v879
    %v881 = vmul.f32 %v472, %v464
    %v882 = vmul.f32 %v474, %v462
    %v883 = vsub.f32 %v881, %v882
    %v884 = vadd.f32 %v467, %v877
    %v885 = vadd.f32 %v469, %v880
    %v886 = vadd.f32 %v471, %v883
    %v887 = vmul.f32 %v884, %v884
    %v888 = vmul.f32 %v885, %v885
    %v889 = vadd.f32 %v887, %v888
    %v890 = vmul.f32 %v886, %v886
    %v891 = vadd.f32 %v889, %v890
    %v892 = vsel %vm583, %v891, 0.0
    %893 = vadd.xlane.f32.xlu0 %v892
    %v894 = vpop.xlane.xlu0 %893
    %v895 = vrot.slane %v894, 4
    %v896 = vadd.f32 %v894, %v895
    %v897 = vrot.slane %v896, 2
    %v898 = vadd.f32 %v896, %v897
    %v899 = vrot.slane %v898, 1
    %v900 = vadd.f32 %v898, %v899
    %s901 = vtos %v900
    %902 = vrot.lane.b32.xlu0 %v877, 8
    %v903 = vpop.permute.xlu0 %902
    %v904 = vsel %vm149, %v903, %v877
    %905 = vrot.lane.b32.xlu0 %v904, 8
    %v906 = vpop.permute.xlu0 %905
    %v907 = vsel %vm149, %v906, %v877
    %908 = vrot.lane.b32.xlu0 %v880, 8
    %v909 = vpop.permute.xlu0 %908
    %v910 = vsel %vm149, %v909, %v880
    %911 = vrot.lane.b32.xlu0 %v910, 8
    %v912 = vpop.permute.xlu0 %911
    %v913 = vsel %vm149, %v912, %v880
    %914 = vrot.lane.b32.xlu0 %v883, 8
    %v915 = vpop.permute.xlu0 %914
    %v916 = vsel %vm149, %v915, %v883
    %917 = vrot.lane.b32.xlu0 %v916, 8
    %v918 = vpop.permute.xlu0 %917
    %v919 = vsel %vm149, %v918, %v883
    %v920 = vmul.f32 %v444, %v495
    %v921 = vmul.f32 %v461, %v511
    %v922 = vadd.f32 %v920, %v921
    %v923 = vmul.f32 %v455, %v495
    %925 = vrot.lane.b32.xlu0 %v923, 6
    %v926 = vpop.permute.xlu0 %925
    %v928 = vadd.f32 %v922, %v926
    %v929 = vmul.f32 %v339, %v919
    %931 = vrot.lane.b32.xlu0 %v883, 7
    %v932 = vpop.permute.xlu0 %931
    %v934 = vmul.f32 %v351, %v932
    %v935 = vadd.f32 %v929, %v934
    %937 = vrot.lane.b32.xlu0 %v919, 6
    %v938 = vpop.permute.xlu0 %937
    %v940 = vmul.f32 %v349, %v938
    %v941 = vadd.f32 %v935, %v940
    %v942 = vmul.f32 %v427, %v913
    %944 = vrot.lane.b32.xlu0 %v880, 7
    %v945 = vpop.permute.xlu0 %944
    %v947 = vmul.f32 %v439, %v945
    %v948 = vadd.f32 %v942, %v947
    %950 = vrot.lane.b32.xlu0 %v913, 6
    %v951 = vpop.permute.xlu0 %950
    %v953 = vmul.f32 %v437, %v951
    %v954 = vadd.f32 %v948, %v953
    %v955 = vsub.f32 %v941, %v954
    %v956 = vsub.f32 %v928, %v955
    %v957 = vmul.f32 %v444, %v501
    %v958 = vmul.f32 %v461, %v534
    %v959 = vadd.f32 %v957, %v958
    %v960 = vmul.f32 %v455, %v501
    %962 = vrot.lane.b32.xlu0 %v960, 6
    %v963 = vpop.permute.xlu0 %962
    %v965 = vadd.f32 %v959, %v963
    %v966 = vmul.f32 %v427, %v907
    %968 = vrot.lane.b32.xlu0 %v877, 7
    %v969 = vpop.permute.xlu0 %968
    %v971 = vmul.f32 %v439, %v969
    %v972 = vadd.f32 %v966, %v971
    %974 = vrot.lane.b32.xlu0 %v907, 6
    %v975 = vpop.permute.xlu0 %974
    %v977 = vmul.f32 %v437, %v975
    %v978 = vadd.f32 %v972, %v977
    %v979 = vmul.f32 %v251, %v919
    %v980 = vmul.f32 %v263, %v932
    %v981 = vadd.f32 %v979, %v980
    %v982 = vmul.f32 %v261, %v938
    %v983 = vadd.f32 %v981, %v982
    %v984 = vsub.f32 %v978, %v983
    %v985 = vsub.f32 %v965, %v984
    %v986 = vmul.f32 %v444, %v507
    %v987 = vmul.f32 %v461, %v557
    %v988 = vadd.f32 %v986, %v987
    %v989 = vmul.f32 %v455, %v507
    %991 = vrot.lane.b32.xlu0 %v989, 6
    %v992 = vpop.permute.xlu0 %991
    %v994 = vadd.f32 %v988, %v992
    %v995 = vmul.f32 %v251, %v913
    %v996 = vmul.f32 %v263, %v945
    %v997 = vadd.f32 %v995, %v996
    %v998 = vmul.f32 %v261, %v951
    %v999 = vadd.f32 %v997, %v998
    %v1000 = vmul.f32 %v339, %v907
    %v1001 = vmul.f32 %v351, %v969
    %v1002 = vadd.f32 %v1000, %v1001
    %v1003 = vmul.f32 %v349, %v975
    %v1004 = vadd.f32 %v1002, %v1003
    %v1005 = vsub.f32 %v999, %v1004
    %v1006 = vsub.f32 %v994, %v1005
    %v1007 = vmul.f32 %v956, %v956
    %v1008 = vmul.f32 %v985, %v985
    %v1009 = vadd.f32 %v1007, %v1008
    %v1010 = vmul.f32 %v1006, %v1006
    %v1011 = vadd.f32 %v1009, %v1010
    %1013 = vrot.lane.b32.xlu0 %v1011, 121
    %v1014 = vpop.permute.xlu0 %1013
    %v1016 = vsel %vm583, %v1014, 0.0
    %1017 = vadd.xlane.f32.xlu0 %v1016
    %v1018 = vpop.xlane.xlu0 %1017
    %v1019 = vrot.slane %v1018, 4
    %v1020 = vadd.f32 %v1018, %v1019
    %v1021 = vrot.slane %v1020, 2
    %v1022 = vadd.f32 %v1020, %v1021
    %v1023 = vrot.slane %v1022, 1
    %v1024 = vadd.f32 %v1022, %v1023
    %s1025 = vtos %v1024
    %v1026 = vmul.f32 %v484, %v466
    %v1027 = vmul.f32 %v486, %v464
    %v1028 = vsub.f32 %v1026, %v1027
    %v1029 = vmul.f32 %v486, %v462
    %v1030 = vmul.f32 %v482, %v466
    %v1031 = vsub.f32 %v1029, %v1030
    %v1032 = vmul.f32 %v482, %v464
    %v1033 = vmul.f32 %v484, %v462
    %v1034 = vsub.f32 %v1032, %v1033
    %1036 = vrot.lane.b32.xlu0 %v520, 121
    %v1037 = vpop.permute.xlu0 %1036
    %v1039 = vmul.f32 %v462, %v1037
    %1041 = vrot.lane.b32.xlu0 %v525, 121
    %v1042 = vpop.permute.xlu0 %1041
    %v1044 = vmul.f32 %v464, %v1042
    %v1045 = vadd.f32 %v1039, %v1044
    %1047 = vrot.lane.b32.xlu0 %v530, 121
    %v1048 = vpop.permute.xlu0 %1047
    %v1050 = vmul.f32 %v466, %v1048
    %v1051 = vadd.f32 %v1045, %v1050
    %1053 = vrot.lane.b32.xlu0 %v543, 121
    %v1054 = vpop.permute.xlu0 %1053
    %v1056 = vmul.f32 %v462, %v1054
    %1058 = vrot.lane.b32.xlu0 %v548, 121
    %v1059 = vpop.permute.xlu0 %1058
    %v1061 = vmul.f32 %v464, %v1059
    %v1062 = vadd.f32 %v1056, %v1061
    %1064 = vrot.lane.b32.xlu0 %v553, 121
    %v1065 = vpop.permute.xlu0 %1064
    %v1067 = vmul.f32 %v466, %v1065
    %v1068 = vadd.f32 %v1062, %v1067
    %1070 = vrot.lane.b32.xlu0 %v566, 121
    %v1071 = vpop.permute.xlu0 %1070
    %v1073 = vmul.f32 %v462, %v1071
    %1075 = vrot.lane.b32.xlu0 %v571, 121
    %v1076 = vpop.permute.xlu0 %1075
    %v1078 = vmul.f32 %v464, %v1076
    %v1079 = vadd.f32 %v1073, %v1078
    %1081 = vrot.lane.b32.xlu0 %v576, 121
    %v1082 = vpop.permute.xlu0 %1081
    %v1084 = vmul.f32 %v466, %v1082
    %v1085 = vadd.f32 %v1079, %v1084
    %v1086 = vmul.f32 %v462, %v462
    %v1087 = vmul.f32 %v464, %v464
    %v1088 = vadd.f32 %v1086, %v1087
    %v1089 = vmul.f32 %v466, %v466
    %v1090 = vadd.f32 %v1088, %v1089
    %v1091 = vmul.f32 %v1090, 397887.34
    %1092 = vrot.lane.b32.xlu0 %v1091, 8
    %v1093 = vpop.permute.xlu0 %1092
    %v1094 = vsel %vm149, %v1093, %v1091
    %1095 = vrot.lane.b32.xlu0 %v1094, 8
    %v1096 = vpop.permute.xlu0 %1095
    %v1097 = vsel %vm149, %v1096, %v1091
    %v1098 = vmul.f32 %v1051, 795774.7
    %v1099 = vsub.f32 %v1028, %v1098
    %v1100 = vmul.f32 %v251, %v1097
    %1102 = vrot.lane.b32.xlu0 %v1091, 7
    %v1103 = vpop.permute.xlu0 %1102
    %v1105 = vmul.f32 %v263, %v1103
    %v1106 = vadd.f32 %v1100, %v1105
    %1108 = vrot.lane.b32.xlu0 %v1097, 6
    %v1109 = vpop.permute.xlu0 %1108
    %v1111 = vmul.f32 %v261, %v1109
    %v1112 = vadd.f32 %v1106, %v1111
    %1114 = vrot.lane.b32.xlu0 %v1112, 121
    %v1115 = vpop.permute.xlu0 %1114
    %v1117 = vadd.f32 %v1099, %v1115
    %v1118 = vmul.f32 %v1068, 795774.7
    %v1119 = vsub.f32 %v1031, %v1118
    %v1120 = vmul.f32 %v339, %v1097
    %v1121 = vmul.f32 %v351, %v1103
    %v1122 = vadd.f32 %v1120, %v1121
    %v1123 = vmul.f32 %v349, %v1109
    %v1124 = vadd.f32 %v1122, %v1123
    %1126 = vrot.lane.b32.xlu0 %v1124, 121
    %v1127 = vpop.permute.xlu0 %1126
    %v1129 = vadd.f32 %v1119, %v1127
    %v1130 = vmul.f32 %v1085, 795774.7
    %v1131 = vsub.f32 %v1034, %v1130
    %v1132 = vmul.f32 %v427, %v1097
    %v1133 = vmul.f32 %v439, %v1103
    %v1134 = vadd.f32 %v1132, %v1133
    %v1135 = vmul.f32 %v437, %v1109
    %v1136 = vadd.f32 %v1134, %v1135
    %1138 = vrot.lane.b32.xlu0 %v1136, 121
    %v1139 = vpop.permute.xlu0 %1138
    %v1141 = vadd.f32 %v1131, %v1139
    %v1142 = vmul.f32 %v1117, %v1117
    %v1143 = vmul.f32 %v1129, %v1129
    %v1144 = vadd.f32 %v1142, %v1143
    %v1145 = vmul.f32 %v1141, %v1141
    %v1146 = vadd.f32 %v1144, %v1145
    %v1147 = vsel %vm583, %v1146, 0.0
    %1148 = vadd.xlane.f32.xlu0 %v1147
    %v1149 = vpop.xlane.xlu0 %1148
    %v1150 = vrot.slane %v1149, 4
    %v1151 = vadd.f32 %v1149, %v1150
    %v1152 = vrot.slane %v1151, 2
    %v1153 = vadd.f32 %v1151, %v1152
    %v1154 = vrot.slane %v1153, 1
    %v1155 = vadd.f32 %v1153, %v1154
    %s1156 = vtos %v1155
    %s1157 = sld [smem:[#allocation13]]
    %s1158 = smul.f32 %s593, 0.0625
    %s1159 = sadd.f32 %s1157, %s1158
    %s1160 = scalar_lea.smem [#allocation13], 0
    %1161 = sst [smem:[%s1160]] %s1159
    %s1162 = sld [smem:[#allocation13 + $0x1]]
    %s1163 = smul.f32 %s672, 0.0625
    %s1164 = sadd.f32 %s1162, %s1163
    %s1165 = scalar_lea.smem [#allocation13], 1
    %1166 = sst [smem:[%s1165]] %s1164
    %s1167 = sld [smem:[#allocation13 + $0x2]]
    %s1168 = smul.f32 %s714, 0.020833334
    %s1169 = sadd.f32 %s1167, %s1168
    %s1170 = scalar_lea.smem [#allocation13], 2
    %1171 = sst [smem:[%s1170]] %s1169
    %s1172 = sld [smem:[#allocation13 + $0x3]]
    %s1173 = smul.f32 %s811, 0.0625
    %s1174 = sadd.f32 %s1172, %s1173
    %s1175 = scalar_lea.smem [#allocation13], 3
    %1176 = sst [smem:[%s1175]] %s1174
    %s1177 = sld [smem:[#allocation13 + $0x4]]
    %s1178 = smul.f32 %s874, 0.0625
    %s1179 = sadd.f32 %s1177, %s1178
    %s1180 = scalar_lea.smem [#allocation13], 4
    %1181 = sst [smem:[%s1180]] %s1179
    %s1182 = sld [smem:[#allocation13 + $0x5]]
    %s1183 = smul.f32 %s901, 0.020833334
    %s1184 = sadd.f32 %s1182, %s1183
    %s1185 = scalar_lea.smem [#allocation13], 5
    %1186 = sst [smem:[%s1185]] %s1184
    %s1187 = sld [smem:[#allocation13 + $0x6]]
    %s1188 = smul.f32 %s1025, 0.020833334
    %s1189 = sadd.f32 %s1187, %s1188
    %s1190 = scalar_lea.smem [#allocation13], 6
    %1191 = sst [smem:[%s1190]] %s1189
    %s1192 = sld [smem:[#allocation13 + $0x7]]
    %s1193 = smul.f32 %s1156, 0.020833334
    %s1194 = sadd.f32 %s1192, %s1193
    %s1195 = scalar_lea.smem [#allocation13], 7
    %1196 = sst [smem:[%s1195]] %s1194
    // Predicated region
    $region66: #{tpu_custom_call.1} parent=1 // pred_check
      _
    $region67: #{tpu_custom_call.1} parent=1 // pred_check_branch
      %1198 = sbr.rel (0) target = $region69
    $region68: #{tpu_custom_call.1} parent=1 // pred_region
      %1200 = vsyncadd [#allocation4], 0
      %s1202 = sshll.u32 %s9, 4
      %s1203 = int_to_ptr.hbm [resolvable:$true] %s1202
      %1205 = dma.smem_to_hbm [#allocation13], 16, %s1203, [#allocation4]
    $region69: #{tpu_custom_call.1} parent=1 // pred_fallthru
      _
    // Predicated region
    $region70: #{tpu_custom_call.1} parent=1 // pred_check
      _
    $region71: #{tpu_custom_call.1} parent=1 // pred_check_branch
      %1207 = sbr.rel (0) target = $region73
    $region72: #{tpu_custom_call.1} parent=1 // pred_region
      %1209 = dma.done [#allocation4], 16
    $region73: #{tpu_custom_call.1} parent=1 // pred_fallthru
      _
    %1210 = sfence
    %1211 = vsyncpa [#allocation3], 1
    %1212 = vsyncpa [#allocation6], 1
    %1213 = vsyncpa [#allocation9], 1
    %1214 = vsyncpa [#allocation12], 1
    %1215 = vsyncpa [#allocation4], 1

</llo_original>
